<compile_context>
chip_gen: v7x
topology: tpu7x:2x2x1
jax: 0.10.0
libtpu: 0.0.40
codegen_flags: <defaults>
</compile_context>

<pallas_src>
import jax
import jax.numpy as jnp
from jax.experimental import pallas as pl
from jax.experimental.pallas import tpu as pltpu


LANES = 128
DILS = (1, 1, 2, 4)          # dilations of the 4 TCN layers used by forward()


def _tail_lengths(dils):
    """Contiguous tail outputs each layer must produce for the last step."""
    need = [1]
    for d in reversed(dils[1:]):
        need.append(need[-1] + d)
    return tuple(reversed(need))


NEED = _tail_lengths(DILS)   # (8, 7, 5, 1)
RF = NEED[0] + DILS[0]       # 9 input time steps feed the last TCN output


def init_params(key, D, H1, H2):
    """Deterministic synthetic parameters, PyTorch-shaped (out, in, ...)."""
    keys = iter(jax.random.split(key, 32))
    n = lambda shape: 0.1 * jax.random.normal(next(keys), shape, jnp.float32)
    p = {}
    p["tcn0_w"] = n((H1, D, 1, 2))
    p["tcn0_b"] = n((H1,))
    for i in (1, 2, 3):
        p[f"tcn{i}_w"] = n((H1, H1, 1, 2))
        p[f"tcn{i}_b"] = n((H1,))
    p["lin1_w"] = n((H1, H1))
    p["lin1_b"] = n((H1,))
    p["emb_w"] = n((H2, H1, 1))
    p["emb_b"] = n((H2,))
    p["q_w"] = n((1, H2, 1))
    p["q_b"] = n((1,))
    p["k_w"] = n((1, H2, 1))
    p["k_b"] = n((1,))
    p["lin3_w"] = n((D, H2))
    p["lin3_b"] = n((D,))
    return p


def _pack_params(params, D, H1, H2, V):
    """Pack every weight/bias into one lane-padded (rows, 128) f32 slab.

    Returns (slab, offsets); offsets[name] = (row, nrows, ncols) for static
    `w_ref[row:row+nrows, 0:ncols]` slicing inside the kernel.  Every band is
    padded to a multiple of 8 rows so all slices are sublane-aligned (asserted).
    """
    HP = jax.lax.Precision.HIGHEST
    bands, off = [], {}
    row = 0

    def add(name, a):
        nonlocal row
        a = jnp.asarray(a, jnp.float32)
        nrows, ncols = a.shape
        assert ncols <= LANES
        pad_r = (-nrows) % 8
        bands.append(jnp.pad(a, ((0, pad_r), (0, LANES - ncols))))
        off[name] = (row, nrows, ncols)
        row += nrows + pad_r

    # TCN conv layers: both taps stacked on the contraction axis -> one fused
    # (rows, 2C) @ (2C, H1) matmul per layer inside the kernel.
    W0 = params["tcn0_w"]                                             # (H1, D, 1, 2)
    add("t0w", jnp.concatenate([W0[:, :, 0, 0].T, W0[:, :, 0, 1].T], axis=0))
    for i in (1, 2, 3):
        Wi = params[f"tcn{i}_w"]                                      # (H1, H1, 1, 2)
        add(f"t{i}w", jnp.concatenate([Wi[:, :, 0, 0].T, Wi[:, :, 0, 1].T], axis=0))
    add("l1w", params["lin1_w"].T)                                    # (H1, H1)

    # emb weight with the k projection pre-composed as one extra output column:
    #   k_score = k_w . (emb_W z + emb_b) + k_b
    #           = z . (emb_W^T k_w)  +  (k_w . emb_b + k_b)
    ew = params["emb_w"][:, :, 0]                                     # (H2, H1)
    kw = params["k_w"][0, :, 0]                                       # (H2,)
    add("ewk", jnp.concatenate([ew.T, jnp.dot(ew.T, kw, precision=HP)[:, None]],
                               axis=1))                               # (H1, H2+1)
    add("l3w", params["lin3_w"])                                      # (D, H2) -> 8 padded rows

    # misc: one small vector per row (row order used by the kernel):
    #   0-3 tcn biases, 4 lin1_b, 5 [emb_b | fused k bias], 6 [q_w | q_b],
    #   7 decoder bias row [0]*V ++ lin3_b ++ 0-pad
    l3pad = ((D + 7) // 8) * 8
    outw = V + l3pad
    k_bias = jnp.dot(kw, params["emb_b"], precision=HP) + params["k_b"][0]
    rows = [
        params["tcn0_b"], params["tcn1_b"], params["tcn2_b"], params["tcn3_b"],
        params["lin1_b"],
        jnp.concatenate([params["emb_b"], k_bias[None]]),
        jnp.concatenate([params["q_w"][0, :, 0], params["q_b"]]),
        jnp.concatenate([jnp.zeros((V,), jnp.float32), params["lin3_b"],
                         jnp.zeros((outw - V - D,), jnp.float32)]),
    ]
    misc = jnp.zeros((8, LANES), jnp.float32)
    for i, v in enumerate(rows):
        misc = misc.at[i, :v.shape[0]].set(v)
    add("misc", misc)

    slab = jnp.concatenate(bands, axis=0)
    # packing invariants (review): every band starts on a sublane tile and the
    # total row count matches the recorded offsets.
    assert slab.shape == (row, LANES)
    assert all(r0 % 8 == 0 for r0, _, _ in off.values())
    return slab, off


def anodae2_forward(data, adj, params):
    """data: (B, T, V, D) f32, adj: (V, V) f32 -> (rec_A (B,V,V), rec_real (B,V,D))."""
    B, T, V, D = data.shape
    H1 = params["lin1_w"].shape[0]
    H2 = params["emb_w"].shape[0]
    l3pad = ((D + 7) // 8) * 8
    OUTW = V + l3pad                      # [rec_A | rec_real | zero pad]
    assert T >= RF, "sequence length must cover the TCN receptive field (9)"
    assert max(2 * H1, H2 + 1, OUTW) <= LANES

    slab, off = _pack_params(params, D, H1, H2, V)

    # Pure reshape (no slice / concat) -> no real wrapper-side XLA work; the
    # layer-0 taps are static row slices of this ref inside the kernel.
    x_flat = data.reshape(B * T * V, D)

    f32 = jnp.float32
    n0 = NEED[0]
    TV = T * V
    base = (T - RF) * V

    def kernel(x_ref, adj_ref, w_ref, out_ref):
        def band(name):
            r0, nr, nc = off[name]
            return w_ref[r0:r0 + nr, 0:nc]

        mrow = off["misc"][0]

        def mvec(i, c0, c1):
            return w_ref[mrow + i:mrow + i + 1, c0:c1]        # (1, c1-c0)

        def taps(load, stride, n, d):
            """Batch-folded, lane-concatenated dilated tap pair -> (B*n*V, 2C)."""
            t0 = jnp.concatenate([load(b * stride, n * V) for b in range(B)], axis=0)
            t1 = jnp.concatenate([load(b * stride + d * V, n * V) for b in range(B)], axis=0)
            return jnp.concatenate([t0, t1], axis=1)

        # ---------- TCN: backward cone of the last output step, batches folded ----------
        h = jnp.dot(taps(lambda s, l: x_ref[base + s:base + s + l, :], TV, n0, DILS[0]),
                    band("t0w"), preferred_element_type=f32) + mvec(0, 0, H1)
        for i in range(1, 4):
            d, n = DILS[i], NEED[i]
            h = jnp.dot(taps(lambda s, l: h[s:s + l, :], NEED[i - 1] * V, n, d),
                        band(f"t{i}w"), preferred_element_type=f32) + mvec(i, 0, H1)
        # h: (B*V, H1) == TCN(x)[..., -1], rows ordered (batch, node)

        # ---------- linear1 + ReLU ----------
        z = jnp.maximum(jnp.dot(h, band("l1w"), preferred_element_type=f32)
                        + mvec(4, 0, H1), 0.0)                               # (B*V, H1)

        # ---------- NodeAttention: emb projection with fused k-score column ----------
        sk = jnp.dot(z, band("ewk"), preferred_element_type=f32) + mvec(5, 0, H2 + 1)
        s_all = sk[:, 0:H2]                                                  # seq_fts (B*V, H2)
        k_all = sk[:, H2:H2 + 1]                                             # k scores (B*V, 1)

        adjm = adj_ref[...]                                                  # (V, V)
        qw = jnp.broadcast_to(mvec(6, 0, H2), (V, H2))                       # q weights x V rows
        qb = mvec(6, H2, H2 + 1)                                             # (1, 1)
        r3 = off["l3w"][0]
        l3w = w_ref[r3:r3 + l3pad, 0:H2]                                     # lin3_W zero-padded
        dec_b = mvec(7, 0, OUTW)                                             # [0]*V ++ lin3_b ++ 0

        # ---------- per-batch attention + fused decoder (B unrolled, 1 tile/slice) ----------
        for b in range(B):
            s_b = s_all[b * V:(b + 1) * V, :]                                # (V, H2)
            # row-constant q-score matrix (q[j] in every row) straight off the MXU
            qmat = jax.lax.dot_general(qw, s_b, (((1,), (1,)), ((), ())),
                                       preferred_element_type=f32) + qb      # (V, V)
            f = adjm * (qmat + k_all[b * V:(b + 1) * V, :])                  # adj * (f1 + f2^T)
            f = jnp.where(f >= 0.0, f, 0.01 * f)                             # leaky_relu
            e = jnp.exp(f - jnp.max(f, axis=0, keepdims=True))
            coefs = e / jnp.sum(e, axis=0, keepdims=True)                    # softmax (torch dim=1)
            vals = jnp.dot(coefs, s_b, preferred_element_type=f32)           # (V, H2)
            # fused decoder: [vals @ vals^T | vals @ lin3_W^T | 0] in one MXU dot
            rhs = jnp.concatenate([vals, l3w], axis=0)                       # (V + l3pad, H2)
            out_ref[b] = jax.lax.dot_general(vals, rhs, (((1,), (1,)), ((), ())),
                                             preferred_element_type=f32) + dec_b

    out = pl.pallas_call(
        kernel,
        out_shape=jax.ShapeDtypeStruct((B, V, OUTW), jnp.float32),
        grid=(1,),
        in_specs=[pl.BlockSpec((B * T * V, D), lambda i: (0, 0)),
                  pl.BlockSpec((V, V), lambda i: (0, 0)),
                  pl.BlockSpec(slab.shape, lambda i: (0, 0))],
        out_specs=pl.BlockSpec((B, V, OUTW), lambda i: (0, 0, 0)),
        compiler_params=pltpu.CompilerParams(dimension_semantics=("arbitrary",)),
    )(x_flat, adj, slab)

    return out[:, :, :V], out[:, :, V:V + D]


def reference_forward(data, adj, params):
    """Pure-JAX mirror of the PyTorch forward (for validation)."""
    x = jnp.transpose(data, (0, 3, 2, 1))  # (B, D, V, T)  == NCHW (H=V, W=T)
    for i, d in enumerate(DILS):
        W = params[f"tcn{i}_w"]
        b = params[f"tcn{i}_b"]
        x = jax.lax.conv_general_dilated(
            x, W, window_strides=(1, 1), padding="VALID", rhs_dilation=(1, d),
            dimension_numbers=("NCHW", "OIHW", "NCHW"),
            precision=jax.lax.Precision.HIGHEST) + b[None, :, None, None]
    y = jnp.transpose(x[..., -1], (0, 2, 1))                    # (B, V, H1)
    z = jnp.maximum(jnp.einsum("bvh,oh->bvo", y, params["lin1_w"],
                               precision=jax.lax.Precision.HIGHEST)
                    + params["lin1_b"], 0.0)
    X = jnp.transpose(z, (0, 2, 1))                              # (B, H1, V)
    S = (jnp.einsum("oi,biv->bov", params["emb_w"][:, :, 0], X,
                    precision=jax.lax.Precision.HIGHEST)
         + params["emb_b"][None, :, None])                       # (B, H2, V)
    f1 = (jnp.einsum("oi,biv->bov", params["q_w"][:, :, 0], S,
                     precision=jax.lax.Precision.HIGHEST)
          + params["q_b"][None, :, None])                        # (B, 1, V)
    f2 = (jnp.einsum("oi,biv->bov", params["k_w"][:, :, 0], S,
                     precision=jax.lax.Precision.HIGHEST)
          + params["k_b"][None, :, None])
    f = f1 + jnp.transpose(f2, (0, 2, 1))                        # (B, V, V)
    f = adj[None] * f
    f = jnp.where(f >= 0.0, f, 0.01 * f)
    coefs = jax.nn.softmax(f, axis=1)
    vals = jnp.einsum("bij,bjh->bih", coefs, jnp.transpose(S, (0, 2, 1)),
                      precision=jax.lax.Precision.HIGHEST)
    rec_A = jnp.einsum("bih,bjh->bij", vals, vals,
                       precision=jax.lax.Precision.HIGHEST)
    rec_real = jnp.einsum("bvh,oh->bvo", vals, params["lin3_w"],
                          precision=jax.lax.Precision.HIGHEST) + params["lin3_b"]
    return rec_A, rec_real


if __name__ == "__main__":
    # opt-equivalent: num_adj=8, num_feature=4, hidden1=32, hidden2=32,
    #                 emb='cnn', act='relu', dropout=0.0
    B, T, V, D, H1, H2 = 2, 12, 8, 4, 32, 32

    key = jax.random.PRNGKey(0)
    kd, ka, kp = jax.random.split(key, 3)
    data = jax.random.normal(kd, (B, T, V, D), jnp.float32)
    adj = (jax.random.uniform(ka, (V, V)) > 0.5).astype(jnp.float32)
    time_idx = jnp.arange(T, dtype=jnp.float32)  # unused by forward (signature parity)
    params = init_params(kp, D, H1, H2)

    rec_A, rec_real = anodae2_forward(data, adj, params)
    jax.block_until_ready((rec_A, rec_real))

    assert rec_A.shape == (B, V, V) and rec_real.shape == (B, V, D)
    ref_A, ref_real = reference_forward(data, adj, params)
    assert jnp.allclose(rec_A, ref_A, rtol=5e-3, atol=5e-4), "rec_A mismatch"
    assert jnp.allclose(rec_real, ref_real, rtol=5e-3, atol=5e-4), "rec_real mismatch"
    print("KERNEL_OK")
</pallas_src>

<mosaic_0001>
module attributes {stable_mosaic.version = 11 : i64} {
  func.func @kernel(%arg0: i32, %arg1: memref<192x4xf32, #tpu.memory_space<vmem>>, %arg2: memref<8x8xf32, #tpu.memory_space<vmem>>, %arg3: memref<280x128xf32, #tpu.memory_space<vmem>>, %arg4: memref<2x8x16xf32, #tpu.memory_space<vmem>>) attributes {dimension_semantics = [#tpu.dimension_semantics<arbitrary>], iteration_bounds = array<i64: 1>, scalar_prefetch = 0 : i64, scratch_operands = 0 : i64, tpu.core_type = #tpu.core_type<tc>, window_params = [{pipeline_mode = #tpu.pipeline_mode<synchronous>, transform_indices = @transform_0, window_bounds = array<i64: 192, 4>}, {pipeline_mode = #tpu.pipeline_mode<synchronous>, transform_indices = @transform_1, window_bounds = array<i64: 8, 8>}, {pipeline_mode = #tpu.pipeline_mode<synchronous>, transform_indices = @transform_2, window_bounds = array<i64: 280, 128>}, {pipeline_mode = #tpu.pipeline_mode<synchronous>, transform_indices = @transform_3, window_bounds = array<i64: 2, 8, 16>}]} {
    %c24 = arith.constant 24 : index
    %c0 = arith.constant 0 : index
    %0 = vector.load %arg1[%c24, %c0] : memref<192x4xf32, #tpu.memory_space<vmem>>, vector<64x4xf32>
    %c120 = arith.constant 120 : index
    %c0_0 = arith.constant 0 : index
    %1 = vector.load %arg1[%c120, %c0_0] : memref<192x4xf32, #tpu.memory_space<vmem>>, vector<64x4xf32>
    %2 = tpu.concatenate %0, %1 in 0 : vector<64x4xf32>, vector<64x4xf32> -> vector<128x4xf32>
    %c32 = arith.constant 32 : index
    %c0_1 = arith.constant 0 : index
    %3 = vector.load %arg1[%c32, %c0_1] : memref<192x4xf32, #tpu.memory_space<vmem>>, vector<64x4xf32>
    %c128 = arith.constant 128 : index
    %c0_2 = arith.constant 0 : index
    %4 = vector.load %arg1[%c128, %c0_2] : memref<192x4xf32, #tpu.memory_space<vmem>>, vector<64x4xf32>
    %5 = tpu.concatenate %3, %4 in 0 : vector<64x4xf32>, vector<64x4xf32> -> vector<128x4xf32>
    %6 = tpu.concatenate %2, %5 in 1 : vector<128x4xf32>, vector<128x4xf32> -> vector<128x8xf32>
    %c0_3 = arith.constant 0 : index
    %c0_4 = arith.constant 0 : index
    %7 = vector.load %arg3[%c0_3, %c0_4] : memref<280x128xf32, #tpu.memory_space<vmem>>, vector<8x32xf32>
    %cst = arith.constant dense<0.000000e+00> : vector<128x32xf32>
    %8 = tpu.matmul %6, %7, %cst {dimension_numbers = #tpu.dot_dimension_numbers<[1], [0], [0], [1], [0, 0, 1, 1], [], []>} : vector<128x8xf32>, vector<8x32xf32>, vector<128x32xf32> -> vector<128x32xf32>
    %c272 = arith.constant 272 : index
    %c0_5 = arith.constant 0 : index
    %9 = vector.load %arg3[%c272, %c0_5] : memref<280x128xf32, #tpu.memory_space<vmem>>, vector<1x32xf32>
    %10 = vector.broadcast %9 : vector<1x32xf32> to vector<128x32xf32>
    %11 = arith.addf %8, %10 : vector<128x32xf32>
    %12 = vector.extract_strided_slice %11 {offsets = [0, 0], sizes = [56, 32], strides = [1, 1]} : vector<128x32xf32> to vector<56x32xf32>
    %13 = vector.extract_strided_slice %11 {offsets = [64, 0], sizes = [56, 32], strides = [1, 1]} : vector<128x32xf32> to vector<56x32xf32>
    %14 = tpu.concatenate %12, %13 in 0 : vector<56x32xf32>, vector<56x32xf32> -> vector<112x32xf32>
    %15 = vector.extract_strided_slice %11 {offsets = [8, 0], sizes = [56, 32], strides = [1, 1]} : vector<128x32xf32> to vector<56x32xf32>
    %16 = vector.extract_strided_slice %11 {offsets = [72, 0], sizes = [56, 32], strides = [1, 1]} : vector<128x32xf32> to vector<56x32xf32>
    %17 = tpu.concatenate %15, %16 in 0 : vector<56x32xf32>, vector<56x32xf32> -> vector<112x32xf32>
    %18 = tpu.concatenate %14, %17 in 1 : vector<112x32xf32>, vector<112x32xf32> -> vector<112x64xf32>
    %c8 = arith.constant 8 : index
    %c0_6 = arith.constant 0 : index
    %19 = vector.load %arg3[%c8, %c0_6] : memref<280x128xf32, #tpu.memory_space<vmem>>, vector<64x32xf32>
    %cst_7 = arith.constant dense<0.000000e+00> : vector<112x32xf32>
    %20 = tpu.matmul %18, %19, %cst_7 {dimension_numbers = #tpu.dot_dimension_numbers<[1], [0], [0], [1], [0, 0, 1, 1], [], []>} : vector<112x64xf32>, vector<64x32xf32>, vector<112x32xf32> -> vector<112x32xf32>
    %c273 = arith.constant 273 : index
    %c0_8 = arith.constant 0 : index
    %21 = vector.load %arg3[%c273, %c0_8] : memref<280x128xf32, #tpu.memory_space<vmem>>, vector<1x32xf32>
    %22 = vector.broadcast %21 : vector<1x32xf32> to vector<112x32xf32>
    %23 = arith.addf %20, %22 : vector<112x32xf32>
    %24 = vector.extract_strided_slice %23 {offsets = [0, 0], sizes = [40, 32], strides = [1, 1]} : vector<112x32xf32> to vector<40x32xf32>
    %25 = vector.extract_strided_slice %23 {offsets = [56, 0], sizes = [40, 32], strides = [1, 1]} : vector<112x32xf32> to vector<40x32xf32>
    %26 = tpu.concatenate %24, %25 in 0 : vector<40x32xf32>, vector<40x32xf32> -> vector<80x32xf32>
    %27 = vector.extract_strided_slice %23 {offsets = [16, 0], sizes = [40, 32], strides = [1, 1]} : vector<112x32xf32> to vector<40x32xf32>
    %28 = vector.extract_strided_slice %23 {offsets = [72, 0], sizes = [40, 32], strides = [1, 1]} : vector<112x32xf32> to vector<40x32xf32>
    %29 = tpu.concatenate %27, %28 in 0 : vector<40x32xf32>, vector<40x32xf32> -> vector<80x32xf32>
    %30 = tpu.concatenate %26, %29 in 1 : vector<80x32xf32>, vector<80x32xf32> -> vector<80x64xf32>
    %c72 = arith.constant 72 : index
    %c0_9 = arith.constant 0 : index
    %31 = vector.load %arg3[%c72, %c0_9] : memref<280x128xf32, #tpu.memory_space<vmem>>, vector<64x32xf32>
    %cst_10 = arith.constant dense<0.000000e+00> : vector<80x32xf32>
    %32 = tpu.matmul %30, %31, %cst_10 {dimension_numbers = #tpu.dot_dimension_numbers<[1], [0], [0], [1], [0, 0, 1, 1], [], []>} : vector<80x64xf32>, vector<64x32xf32>, vector<80x32xf32> -> vector<80x32xf32>
    %c274 = arith.constant 274 : index
    %c0_11 = arith.constant 0 : index
    %33 = vector.load %arg3[%c274, %c0_11] : memref<280x128xf32, #tpu.memory_space<vmem>>, vector<1x32xf32>
    %34 = vector.broadcast %33 : vector<1x32xf32> to vector<80x32xf32>
    %35 = arith.addf %32, %34 : vector<80x32xf32>
    %36 = vector.extract_strided_slice %35 {offsets = [0, 0], sizes = [8, 32], strides = [1, 1]} : vector<80x32xf32> to vector<8x32xf32>
    %37 = vector.extract_strided_slice %35 {offsets = [40, 0], sizes = [8, 32], strides = [1, 1]} : vector<80x32xf32> to vector<8x32xf32>
    %38 = tpu.concatenate %36, %37 in 0 : vector<8x32xf32>, vector<8x32xf32> -> vector<16x32xf32>
    %39 = vector.extract_strided_slice %35 {offsets = [32, 0], sizes = [8, 32], strides = [1, 1]} : vector<80x32xf32> to vector<8x32xf32>
    %40 = vector.extract_strided_slice %35 {offsets = [72, 0], sizes = [8, 32], strides = [1, 1]} : vector<80x32xf32> to vector<8x32xf32>
    %41 = tpu.concatenate %39, %40 in 0 : vector<8x32xf32>, vector<8x32xf32> -> vector<16x32xf32>
    %42 = tpu.concatenate %38, %41 in 1 : vector<16x32xf32>, vector<16x32xf32> -> vector<16x64xf32>
    %c136 = arith.constant 136 : index
    %c0_12 = arith.constant 0 : index
    %43 = vector.load %arg3[%c136, %c0_12] : memref<280x128xf32, #tpu.memory_space<vmem>>, vector<64x32xf32>
    %cst_13 = arith.constant dense<0.000000e+00> : vector<16x32xf32>
    %44 = tpu.matmul %42, %43, %cst_13 {dimension_numbers = #tpu.dot_dimension_numbers<[1], [0], [0], [1], [0, 0, 1, 1], [], []>} : vector<16x64xf32>, vector<64x32xf32>, vector<16x32xf32> -> vector<16x32xf32>
    %c275 = arith.constant 275 : index
    %c0_14 = arith.constant 0 : index
    %45 = vector.load %arg3[%c275, %c0_14] : memref<280x128xf32, #tpu.memory_space<vmem>>, vector<1x32xf32>
    %46 = vector.broadcast %45 : vector<1x32xf32> to vector<16x32xf32>
    %47 = arith.addf %44, %46 : vector<16x32xf32>
    %c200 = arith.constant 200 : index
    %c0_15 = arith.constant 0 : index
    %48 = vector.load %arg3[%c200, %c0_15] : memref<280x128xf32, #tpu.memory_space<vmem>>, vector<32x32xf32>
    %cst_16 = arith.constant dense<0.000000e+00> : vector<16x32xf32>
    %49 = tpu.matmul %47, %48, %cst_16 {dimension_numbers = #tpu.dot_dimension_numbers<[1], [0], [0], [1], [0, 0, 1, 1], [], []>} : vector<16x32xf32>, vector<32x32xf32>, vector<16x32xf32> -> vector<16x32xf32>
    %c276 = arith.constant 276 : index
    %c0_17 = arith.constant 0 : index
    %50 = vector.load %arg3[%c276, %c0_17] : memref<280x128xf32, #tpu.memory_space<vmem>>, vector<1x32xf32>
    %51 = vector.broadcast %50 : vector<1x32xf32> to vector<16x32xf32>
    %52 = arith.addf %49, %51 : vector<16x32xf32>
    %cst_18 = arith.constant 0.000000e+00 : f32
    %53 = vector.broadcast %cst_18 : f32 to vector<16x32xf32>
    %54 = arith.maximumf %52, %53 : vector<16x32xf32>
    %c232 = arith.constant 232 : index
    %c0_19 = arith.constant 0 : index
    %55 = vector.load %arg3[%c232, %c0_19] : memref<280x128xf32, #tpu.memory_space<vmem>>, vector<32x33xf32>
    %cst_20 = arith.constant dense<0.000000e+00> : vector<16x33xf32>
    %56 = tpu.matmul %54, %55, %cst_20 {dimension_numbers = #tpu.dot_dimension_numbers<[1], [0], [0], [1], [0, 0, 1, 1], [], []>} : vector<16x32xf32>, vector<32x33xf32>, vector<16x33xf32> -> vector<16x33xf32>
    %c277 = arith.constant 277 : index
    %c0_21 = arith.constant 0 : index
    %57 = vector.load %arg3[%c277, %c0_21] : memref<280x128xf32, #tpu.memory_space<vmem>>, vector<1x33xf32>
    %58 = vector.broadcast %57 : vector<1x33xf32> to vector<16x33xf32>
    %59 = arith.addf %56, %58 : vector<16x33xf32>
    %60 = vector.extract_strided_slice %59 {offsets = [0, 0], sizes = [16, 32], strides = [1, 1]} : vector<16x33xf32> to vector<16x32xf32>
    %61 = vector.extract_strided_slice %59 {offsets = [0, 32], sizes = [16, 1], strides = [1, 1]} : vector<16x33xf32> to vector<16x1xf32>
    %c0_22 = arith.constant 0 : index
    %c0_23 = arith.constant 0 : index
    %62 = vector.load %arg2[%c0_22, %c0_23] : memref<8x8xf32, #tpu.memory_space<vmem>>, vector<8x8xf32>
    %c278 = arith.constant 278 : index
    %c0_24 = arith.constant 0 : index
    %63 = vector.load %arg3[%c278, %c0_24] : memref<280x128xf32, #tpu.memory_space<vmem>>, vector<1x32xf32>
    %64 = vector.shape_cast %63 : vector<1x32xf32> to vector<1x32xf32>
    %65 = vector.broadcast %64 : vector<1x32xf32> to vector<8x32xf32>
    %c278_25 = arith.constant 278 : index
    %c32_26 = arith.constant 32 : index
    %66 = vector.load %arg3[%c278_25, %c32_26] : memref<280x128xf32, #tpu.memory_space<vmem>>, vector<1x1xf32>
    %c264 = arith.constant 264 : index
    %c0_27 = arith.constant 0 : index
    %67 = vector.load %arg3[%c264, %c0_27] : memref<280x128xf32, #tpu.memory_space<vmem>>, vector<8x32xf32>
    %c279 = arith.constant 279 : index
    %c0_28 = arith.constant 0 : index
    %68 = vector.load %arg3[%c279, %c0_28] : memref<280x128xf32, #tpu.memory_space<vmem>>, vector<1x16xf32>
    %69 = vector.extract_strided_slice %60 {offsets = [0, 0], sizes = [8, 32], strides = [1, 1]} : vector<16x32xf32> to vector<8x32xf32>
    %cst_29 = arith.constant dense<0.000000e+00> : vector<8x8xf32>
    %70 = tpu.matmul %65, %69, %cst_29 {dimension_numbers = #tpu.dot_dimension_numbers<[1], [1], [0], [0], [0, 0, 1, 0], [], []>} : vector<8x32xf32>, vector<8x32xf32>, vector<8x8xf32> -> vector<8x8xf32>
    %71 = vector.broadcast %66 : vector<1x1xf32> to vector<8x8xf32>
    %72 = arith.addf %70, %71 : vector<8x8xf32>
    %73 = vector.extract_strided_slice %61 {offsets = [0, 0], sizes = [8, 1], strides = [1, 1]} : vector<16x1xf32> to vector<8x1xf32>
    %74 = vector.broadcast %73 : vector<8x1xf32> to vector<8x8xf32>
    %75 = arith.addf %72, %74 : vector<8x8xf32>
    %76 = arith.mulf %62, %75 : vector<8x8xf32>
    %cst_30 = arith.constant 0.000000e+00 : f32
    %77 = vector.broadcast %cst_30 : f32 to vector<8x8xf32>
    %78 = arith.cmpf oge, %76, %77 : vector<8x8xf32>
    %cst_31 = arith.constant 0.00999999977 : f32
    %79 = vector.broadcast %cst_31 : f32 to vector<8x8xf32>
    %80 = arith.mulf %79, %76 : vector<8x8xf32>
    %81 = arith.select %78, %76, %80 : vector<8x8xi1>, vector<8x8xf32>
    %cst_32 = arith.constant dense<0xFF800000> : vector<8xf32>
    %82 = vector.multi_reduction <maximumf>, %81, %cst_32 [0] : vector<8x8xf32> to vector<8xf32>
    %83 = vector.shape_cast %82 : vector<8xf32> to vector<1x8xf32>
    %84 = vector.broadcast %83 : vector<1x8xf32> to vector<8x8xf32>
    %85 = arith.subf %81, %84 : vector<8x8xf32>
    %86 = math.exp %85 : vector<8x8xf32>
    %cst_33 = arith.constant dense<0.000000e+00> : vector<8xf32>
    %87 = vector.multi_reduction <add>, %86, %cst_33 [0] : vector<8x8xf32> to vector<8xf32>
    %88 = vector.shape_cast %87 : vector<8xf32> to vector<1x8xf32>
    %89 = vector.broadcast %88 : vector<1x8xf32> to vector<8x8xf32>
    %90 = arith.divf %86, %89 : vector<8x8xf32>
    %cst_34 = arith.constant dense<0.000000e+00> : vector<8x32xf32>
    %91 = tpu.matmul %90, %69, %cst_34 {dimension_numbers = #tpu.dot_dimension_numbers<[1], [0], [0], [1], [0, 0, 1, 1], [], []>} : vector<8x8xf32>, vector<8x32xf32>, vector<8x32xf32> -> vector<8x32xf32>
    %92 = tpu.concatenate %91, %67 in 0 : vector<8x32xf32>, vector<8x32xf32> -> vector<16x32xf32>
    %cst_35 = arith.constant dense<0.000000e+00> : vector<8x16xf32>
    %93 = tpu.matmul %91, %92, %cst_35 {dimension_numbers = #tpu.dot_dimension_numbers<[1], [1], [0], [0], [0, 0, 1, 0], [], []>} : vector<8x32xf32>, vector<16x32xf32>, vector<8x16xf32> -> vector<8x16xf32>
    %94 = vector.broadcast %68 : vector<1x16xf32> to vector<8x16xf32>
    %95 = arith.addf %93, %94 : vector<8x16xf32>
    %c0_36 = arith.constant 0 : index
    %c0_37 = arith.constant 0 : index
    %c0_38 = arith.constant 0 : index
    %96 = vector.load %arg4[%c0_36, %c0_37, %c0_38] : memref<2x8x16xf32, #tpu.memory_space<vmem>>, vector<1x8x16xf32>
    %97 = vector.shape_cast %96 : vector<1x8x16xf32> to vector<8x16xf32>
    %98 = vector.shape_cast %95 : vector<8x16xf32> to vector<1x8x16xf32>
    tpu.vector_store %arg4[%c0_36, %c0_37, %c0_38], %98 {strides = array<i32>} : memref<2x8x16xf32, #tpu.memory_space<vmem>>, vector<1x8x16xf32>,
    %99 = vector.extract_strided_slice %60 {offsets = [8, 0], sizes = [8, 32], strides = [1, 1]} : vector<16x32xf32> to vector<8x32xf32>
    %cst_39 = arith.constant dense<0.000000e+00> : vector<8x8xf32>
    %100 = tpu.matmul %65, %99, %cst_39 {dimension_numbers = #tpu.dot_dimension_numbers<[1], [1], [0], [0], [0, 0, 1, 0], [], []>} : vector<8x32xf32>, vector<8x32xf32>, vector<8x8xf32> -> vector<8x8xf32>
    %101 = vector.broadcast %66 : vector<1x1xf32> to vector<8x8xf32>
    %102 = arith.addf %100, %101 : vector<8x8xf32>
    %103 = vector.extract_strided_slice %61 {offsets = [8, 0], sizes = [8, 1], strides = [1, 1]} : vector<16x1xf32> to vector<8x1xf32>
    %104 = vector.broadcast %103 : vector<8x1xf32> to vector<8x8xf32>
    %105 = arith.addf %102, %104 : vector<8x8xf32>
    %106 = arith.mulf %62, %105 : vector<8x8xf32>
    %cst_40 = arith.constant 0.000000e+00 : f32
    %107 = vector.broadcast %cst_40 : f32 to vector<8x8xf32>
    %108 = arith.cmpf oge, %106, %107 : vector<8x8xf32>
    %cst_41 = arith.constant 0.00999999977 : f32
    %109 = vector.broadcast %cst_41 : f32 to vector<8x8xf32>
    %110 = arith.mulf %109, %106 : vector<8x8xf32>
    %111 = arith.select %108, %106, %110 : vector<8x8xi1>, vector<8x8xf32>
    %cst_42 = arith.constant dense<0xFF800000> : vector<8xf32>
    %112 = vector.multi_reduction <maximumf>, %111, %cst_42 [0] : vector<8x8xf32> to vector<8xf32>
    %113 = vector.shape_cast %112 : vector<8xf32> to vector<1x8xf32>
    %114 = vector.broadcast %113 : vector<1x8xf32> to vector<8x8xf32>
    %115 = arith.subf %111, %114 : vector<8x8xf32>
    %116 = math.exp %115 : vector<8x8xf32>
    %cst_43 = arith.constant dense<0.000000e+00> : vector<8xf32>
    %117 = vector.multi_reduction <add>, %116, %cst_43 [0] : vector<8x8xf32> to vector<8xf32>
    %118 = vector.shape_cast %117 : vector<8xf32> to vector<1x8xf32>
    %119 = vector.broadcast %118 : vector<1x8xf32> to vector<8x8xf32>
    %120 = arith.divf %116, %119 : vector<8x8xf32>
    %cst_44 = arith.constant dense<0.000000e+00> : vector<8x32xf32>
    %121 = tpu.matmul %120, %99, %cst_44 {dimension_numbers = #tpu.dot_dimension_numbers<[1], [0], [0], [1], [0, 0, 1, 1], [], []>} : vector<8x8xf32>, vector<8x32xf32>, vector<8x32xf32> -> vector<8x32xf32>
    %122 = tpu.concatenate %121, %67 in 0 : vector<8x32xf32>, vector<8x32xf32> -> vector<16x32xf32>
    %cst_45 = arith.constant dense<0.000000e+00> : vector<8x16xf32>
    %123 = tpu.matmul %121, %122, %cst_45 {dimension_numbers = #tpu.dot_dimension_numbers<[1], [1], [0], [0], [0, 0, 1, 0], [], []>} : vector<8x32xf32>, vector<16x32xf32>, vector<8x16xf32> -> vector<8x16xf32>
    %124 = vector.broadcast %68 : vector<1x16xf32> to vector<8x16xf32>
    %125 = arith.addf %123, %124 : vector<8x16xf32>
    %c1 = arith.constant 1 : index
    %c0_46 = arith.constant 0 : index
    %c0_47 = arith.constant 0 : index
    %126 = vector.load %arg4[%c1, %c0_46, %c0_47] : memref<2x8x16xf32, #tpu.memory_space<vmem>>, vector<1x8x16xf32>
    %127 = vector.shape_cast %126 : vector<1x8x16xf32> to vector<8x16xf32>
    %128 = vector.shape_cast %125 : vector<8x16xf32> to vector<1x8x16xf32>
    tpu.vector_store %arg4[%c1, %c0_46, %c0_47], %128 {strides = array<i32>} : memref<2x8x16xf32, #tpu.memory_space<vmem>>, vector<1x8x16xf32>,
    return
  }
  func.func @transform_0(%arg0: i32) -> (i32, i32) {
    %c0_i32 = arith.constant 0 : i32
    %c0_i32_0 = arith.constant 0 : i32
    %c0_i32_1 = arith.constant 0 : i32
    return %c0_i32, %c0_i32_0 : i32, i32
  }
  func.func @transform_1(%arg0: i32) -> (i32, i32) {
    %c0_i32 = arith.constant 0 : i32
    %c0_i32_0 = arith.constant 0 : i32
    %c0_i32_1 = arith.constant 0 : i32
    return %c0_i32, %c0_i32_0 : i32, i32
  }
  func.func @transform_2(%arg0: i32) -> (i32, i32) {
    %c0_i32 = arith.constant 0 : i32
    %c0_i32_0 = arith.constant 0 : i32
    %c0_i32_1 = arith.constant 0 : i32
    return %c0_i32, %c0_i32_0 : i32, i32
  }
  func.func @transform_3(%arg0: i32) -> (i32, i32, i32) {
    %c0_i32 = arith.constant 0 : i32
    %c0_i32_0 = arith.constant 0 : i32
    %c0_i32_1 = arith.constant 0 : i32
    %c0_i32_2 = arith.constant 0 : i32
    return %c0_i32, %c0_i32_0, %c0_i32_1 : i32, i32, i32
  }
}

</mosaic_0001>

<llo_original>
// kernel: tpu_custom_call.1
$region0: #{tpu_custom_call.1}
  #allocation0 [shape = 'u32[]', space=smem, size = 0x4, offset = 0x4, fixed_abs, tag = 'smem constant byte address 0x4 - core index']
  #allocation1 [shape = 'u32[144,128]{1,0:T(1,128)}', space=vmem, size = 0x12000, scoped, tag = 'internal scratch']
  %s0 = inlined_call_operand.vmem [shape: f32[192,4], index: 0, kind: input, shape index: {}]
  %s1 = inlined_call_operand.vmem [shape: f32[8,8], index: 1, kind: input, shape index: {}]
  %s2 = inlined_call_operand.hbm [shape: f32[280,128], index: 2, kind: input, shape index: {}]
  %s3 = inlined_call_operand.hbm [shape: f32[2,8,16], index: 3, kind: output, shape index: {}]
  %s4 = sld [smem:[#allocation0]]
  $region26: #{tpu_custom_call.1} parent=0
    _
  %s6 = ssub.s32 1, %s4
  %s7 = scalar_select 0, %s6, %s4
  $region1: #{tpu_custom_call.1} parent=0
    #allocation2 [shape = 'u8[143360]{0}', space=vmem, size = 0x23000, scoped, tag = 'input window, operand 2, single buffered']
    #allocation3 [shape = 's32[1]{0}', space=sflag, size = 0x4, scoped, tag = 'scoped memory for tpu_custom_call.1']
    #allocation4 [shape = 's32[1]{0}', space=sflag, size = 0x4, scoped, tag = 'scoped memory for tpu_custom_call.1']
    #allocation5 [shape = 'u8[8192]{0}', space=vmem, size = 0x2000, scoped, tag = 'output window, operand 0, single buffered']
    %8 = vsyncpa [#allocation3], 0
    %9 = vsyncpa [#allocation4], 0
    // Predicated region
    $region2: #{tpu_custom_call.1} parent=1 // pred_check
      _
    $region3: #{tpu_custom_call.1} parent=1 // pred_check_branch
      %11 = sbr.rel (0) target = $region5
    $region4: #{tpu_custom_call.1} parent=1 // pred_region
      _
    $region5: #{tpu_custom_call.1} parent=1 // pred_fallthru
      _
    // Predicated region
    $region6: #{tpu_custom_call.1} parent=1 // pred_check
      _
    $region7: #{tpu_custom_call.1} parent=1 // pred_check_branch
      %13 = sbr.rel (0) target = $region9
    $region8: #{tpu_custom_call.1} parent=1 // pred_region
      _
    $region9: #{tpu_custom_call.1} parent=1 // pred_fallthru
      _
    // Predicated region
    $region10: #{tpu_custom_call.1} parent=1 // pred_check
      _
    $region11: #{tpu_custom_call.1} parent=1 // pred_check_branch
      %15 = sbr.rel (0) target = $region13
    $region12: #{tpu_custom_call.1} parent=1 // pred_region
      %s17 = ssub.s32 4480, 4480
      %18 = vsyncadd [#allocation3], %s17
      %s19 = sshll.u32 [#allocation2], 4
      %s20 = int_to_ptr.vmem [resolvable:$true] %s19
      %25 = dma.hbm_to_vmem [thread:$0]  %s2, 4480, %s20, [#allocation3], 128, 128, 8
    $region13: #{tpu_custom_call.1} parent=1 // pred_fallthru
      _
    // Predicated region
    $region14: #{tpu_custom_call.1} parent=1 // pred_check
      _
    $region15: #{tpu_custom_call.1} parent=1 // pred_check_branch
      %27 = sbr.rel (0) target = $region17
    $region16: #{tpu_custom_call.1} parent=1 // pred_region
      %28 = dma.done [#allocation3], 4480
    $region17: #{tpu_custom_call.1} parent=1 // pred_fallthru
      _
    %v29 = vld [vmem:[%s0 + $0x18] sm:$0xff]
    %v30 = vld [vmem:[%s0 + $0x20] sm:$0xff]
    %v31 = vld [vmem:[%s0 + $0x28] sm:$0xff]
    %v32 = vld [vmem:[%s0 + $0x30] sm:$0xff]
    %v33 = vld [vmem:[%s0 + $0x38] sm:$0xff]
    %v34 = vld [vmem:[%s0 + $0x40] sm:$0xff]
    %v35 = vld [vmem:[%s0 + $0x48] sm:$0xff]
    %v36 = vld [vmem:[%s0 + $0x50] sm:$0xff]
    %v37 = vld [vmem:[%s0 + $0x78] sm:$0xff]
    %v38 = vld [vmem:[%s0 + $0x80] sm:$0xff]
    %v39 = vld [vmem:[%s0 + $0x88] sm:$0xff]
    %v40 = vld [vmem:[%s0 + $0x90] sm:$0xff]
    %v41 = vld [vmem:[%s0 + $0x98] sm:$0xff]
    %v42 = vld [vmem:[%s0 + $0xa0] sm:$0xff]
    %v43 = vld [vmem:[%s0 + $0xa8] sm:$0xff]
    %v44 = vld [vmem:[%s0 + $0xb0] sm:$0xff]
    %v45 = vld [vmem:[%s0 + $0x58] sm:$0xff]
    %v46 = vld [vmem:[%s0 + $0xb8] sm:$0xff]
    %63 = vrot.lane.b32.xlu0 %v30, 4
    %v64 = vpop.permute.xlu0 %63
    %65 = vrot.lane.b32.xlu0 %v31, 4
    %v66 = vpop.permute.xlu0 %65
    %67 = vrot.lane.b32.xlu0 %v32, 4
    %v68 = vpop.permute.xlu0 %67
    %69 = vrot.lane.b32.xlu0 %v33, 4
    %v70 = vpop.permute.xlu0 %69
    %71 = vrot.lane.b32.xlu0 %v34, 4
    %v72 = vpop.permute.xlu0 %71
    %73 = vrot.lane.b32.xlu0 %v35, 4
    %v74 = vpop.permute.xlu0 %73
    %75 = vrot.lane.b32.xlu0 %v36, 4
    %v76 = vpop.permute.xlu0 %75
    %77 = vrot.lane.b32.xlu0 %v45, 4
    %v78 = vpop.permute.xlu0 %77
    %79 = vrot.lane.b32.xlu0 %v38, 4
    %v80 = vpop.permute.xlu0 %79
    %81 = vrot.lane.b32.xlu0 %v39, 4
    %v82 = vpop.permute.xlu0 %81
    %83 = vrot.lane.b32.xlu0 %v40, 4
    %v84 = vpop.permute.xlu0 %83
    %85 = vrot.lane.b32.xlu0 %v41, 4
    %v86 = vpop.permute.xlu0 %85
    %87 = vrot.lane.b32.xlu0 %v42, 4
    %v88 = vpop.permute.xlu0 %87
    %89 = vrot.lane.b32.xlu0 %v43, 4
    %v90 = vpop.permute.xlu0 %89
    %91 = vrot.lane.b32.xlu0 %v44, 4
    %v92 = vpop.permute.xlu0 %91
    %93 = vrot.lane.b32.xlu0 %v46, 4
    %v94 = vpop.permute.xlu0 %93
    %vm111 = vcmask 31744
    %v112 = vsel %vm111, %v29, %v64
    %v113 = vsel %vm111, %v30, %v66
    %v114 = vsel %vm111, %v31, %v68
    %v115 = vsel %vm111, %v32, %v70
    %v116 = vsel %vm111, %v33, %v72
    %v117 = vsel %vm111, %v34, %v74
    %v118 = vsel %vm111, %v35, %v76
    %v119 = vsel %vm111, %v36, %v78
    %v120 = vsel %vm111, %v37, %v80
    %v121 = vsel %vm111, %v38, %v82
    %v122 = vsel %vm111, %v39, %v84
    %v123 = vsel %vm111, %v40, %v86
    %v124 = vsel %vm111, %v41, %v88
    %v125 = vsel %vm111, %v42, %v90
    %v126 = vsel %vm111, %v43, %v92
    %v127 = vsel %vm111, %v44, %v94
    %v128 = vld [vmem:[#allocation2] sm:$0xff]
    %v129 = vld [vmem:[#allocation2 + $0x110] sm:$0x1]
    %v130 = vlaneseq
    %v131 = vshrl.u32 %v130, 7
    %v132 = vsub.s32 0, %v131
    %v133 = vrot.slane %v129, %v132
    %vm134 = vcmask 64512
    %v136 = vsel %vm134, %v112, 0
    %v139 = vsel %vm134, %v113, 0
    %v142 = vsel %vm134, %v114, 0
    %v145 = vsel %vm134, %v115, 0
    %v148 = vsel %vm134, %v116, 0
    %v151 = vsel %vm134, %v117, 0
    %v154 = vsel %vm134, %v118, 0
    %v157 = vsel %vm134, %v119, 0
    %v160 = vsel %vm134, %v120, 0
    %v163 = vsel %vm134, %v121, 0
    %v166 = vsel %vm134, %v122, 0
    %v169 = vsel %vm134, %v123, 0
    %v172 = vsel %vm134, %v124, 0
    %v175 = vsel %vm134, %v125, 0
    %v178 = vsel %vm134, %v126, 0
    %v181 = vsel %vm134, %v127, 0
    %183 = vmatprep.subr.mxu0 0.0
    %184 = vmatpush1.msra.mxu0 %v128
    %185 = vmatprep.subr.mxu0 0.0
    %186 = vmatpush1.msra.mxu0 0.0
    %187 = vmatprep.subr.mxu0 0.0
    %188 = vmatpush1.msra.mxu0 0.0
    %189 = vmatprep.subr.mxu0 0.0
    %190 = vmatpush1.msra.mxu0 0.0
    %191 = vmatprep.subr.mxu0 0.0
    %192 = vmatpush1.msra.mxu0 0.0
    %193 = vmatprep.subr.mxu0 0.0
    %194 = vmatpush1.msra.mxu0 0.0
    %195 = vmatprep.subr.mxu0 0.0
    %196 = vmatpush1.msra.mxu0 0.0
    %197 = vmatprep.subr.mxu0 0.0
    %198 = vmatpush1.msra.mxu0 0.0
    %199 = vmatprep.subr.mxu0 0.0
    %200 = vmatpush1.msra.mxu0 0.0
    %201 = vmatprep.subr.mxu0 0.0
    %202 = vmatpush1.msra.mxu0 0.0
    %203 = vmatprep.subr.mxu0 0.0
    %204 = vmatpush1.msra.mxu0 0.0
    %205 = vmatprep.subr.mxu0 0.0
    %206 = vmatpush1.msra.mxu0 0.0
    %207 = vmatprep.subr.mxu0 0.0
    %208 = vmatpush1.msra.mxu0 0.0
    %209 = vmatprep.subr.mxu0 0.0
    %210 = vmatpush1.msra.mxu0 0.0
    %211 = vmatprep.subr.mxu0 0.0
    %212 = vmatpush1.msra.mxu0 0.0
    %213 = vmatprep.subr.mxu0 0.0
    %214 = vmatpush1.msra.mxu0 0.0
    %215 = vmatprep.subr.mxu0 0.0
    %216 = vmatpush1.msra.mxu0 0.0
    %217 = vmatprep.subr.mxu0 0.0
    %218 = vmatpush1.msra.mxu0 0.0
    %219 = vmatprep.subr.mxu0 0.0
    %220 = vmatpush1.msra.mxu0 0.0
    %221 = vmatprep.subr.mxu0 0.0
    %222 = vmatpush1.msra.mxu0 0.0
    %223 = vmatprep.subr.mxu0 0.0
    %224 = vmatpush1.msra.mxu0 0.0
    %225 = vmatprep.subr.mxu0 0.0
    %226 = vmatpush1.msra.mxu0 0.0
    %227 = vmatprep.subr.mxu0 0.0
    %228 = vmatpush1.msra.mxu0 0.0
    %229 = vmatprep.subr.mxu0 0.0
    %230 = vmatpush1.msra.mxu0 0.0
    %231 = vmatprep.subr.mxu0 0.0
    %232 = vmatpush1.msra.mxu0 0.0
    %233 = vmatprep.subr.mxu0 0.0
    %234 = vmatpush1.msra.mxu0 0.0
    %235 = vmatprep.subr.mxu0 0.0
    %236 = vmatpush1.msra.mxu0 0.0
    %237 = vmatprep.subr.mxu0 0.0
    %238 = vmatpush1.msra.mxu0 0.0
    %239 = vmatprep.subr.mxu0 0.0
    %240 = vmatpush1.msra.mxu0 0.0
    %241 = vmatprep.subr.mxu0 0.0
    %242 = vmatpush1.msra.mxu0 0.0
    %243 = vmatprep.subr.mxu0 0.0
    %244 = vmatpush1.msra.mxu0 0.0
    %245 = vmatprep.subr.mxu0 0.0
    %246 = vmatpush1.msra.mxu0 0.0
    %247 = vmatprep.mubr.f32.mxu0 0.0
    %248 = vmatmul.mubr.f32.gmra.mrb[0].mxu0 %v136
    %v249 = vpop.f32.mrb[0].mxu0
    %v250 = vadd.f32 %v133, %v249
    %v251 = vpop.f32.mrb[0].mxu0
    %252 = vmatprep.mubr.f32.mxu0 0.0
    %253 = vmatmul.mubr.f32.gmra.mrb[0].mxu0 %v139
    %v254 = vpop.f32.mrb[0].mxu0
    %v255 = vadd.f32 %v133, %v254
    %v256 = vpop.f32.mrb[0].mxu0
    %257 = vmatprep.mubr.f32.mxu0 0.0
    %258 = vmatmul.mubr.f32.gmra.mrb[0].mxu0 %v142
    %v259 = vpop.f32.mrb[0].mxu0
    %v260 = vadd.f32 %v133, %v259
    %v261 = vpop.f32.mrb[0].mxu0
    %262 = vmatprep.mubr.f32.mxu0 0.0
    %263 = vmatmul.mubr.f32.gmra.mrb[0].mxu0 %v145
    %v264 = vpop.f32.mrb[0].mxu0
    %v265 = vadd.f32 %v133, %v264
    %v266 = vpop.f32.mrb[0].mxu0
    %267 = vmatprep.mubr.f32.mxu0 0.0
    %268 = vmatmul.mubr.f32.gmra.mrb[0].mxu0 %v148
    %v269 = vpop.f32.mrb[0].mxu0
    %v270 = vadd.f32 %v133, %v269
    %v271 = vpop.f32.mrb[0].mxu0
    %272 = vmatprep.mubr.f32.mxu0 0.0
    %273 = vmatmul.mubr.f32.gmra.mrb[0].mxu0 %v151
    %v274 = vpop.f32.mrb[0].mxu0
    %v275 = vadd.f32 %v133, %v274
    %v276 = vpop.f32.mrb[0].mxu0
    %277 = vmatprep.mubr.f32.mxu0 0.0
    %278 = vmatmul.mubr.f32.gmra.mrb[0].mxu0 %v154
    %v279 = vpop.f32.mrb[0].mxu0
    %v280 = vadd.f32 %v133, %v279
    %v281 = vpop.f32.mrb[0].mxu0
    %282 = vmatprep.mubr.f32.mxu0 0.0
    %283 = vmatmul.mubr.f32.gmra.mrb[0].mxu0 %v157
    %v284 = vpop.f32.mrb[0].mxu0
    %v285 = vadd.f32 %v133, %v284
    %v286 = vpop.f32.mrb[0].mxu0
    %287 = vmatprep.mubr.f32.mxu0 0.0
    %288 = vmatmul.mubr.f32.gmra.mrb[0].mxu0 %v160
    %v289 = vpop.f32.mrb[0].mxu0
    %v290 = vadd.f32 %v133, %v289
    %v291 = vpop.f32.mrb[0].mxu0
    %292 = vmatprep.mubr.f32.mxu0 0.0
    %293 = vmatmul.mubr.f32.gmra.mrb[0].mxu0 %v163
    %v294 = vpop.f32.mrb[0].mxu0
    %v295 = vadd.f32 %v133, %v294
    %v296 = vpop.f32.mrb[0].mxu0
    %297 = vmatprep.mubr.f32.mxu0 0.0
    %298 = vmatmul.mubr.f32.gmra.mrb[0].mxu0 %v166
    %v299 = vpop.f32.mrb[0].mxu0
    %v300 = vadd.f32 %v133, %v299
    %v301 = vpop.f32.mrb[0].mxu0
    %302 = vmatprep.mubr.f32.mxu0 0.0
    %303 = vmatmul.mubr.f32.gmra.mrb[0].mxu0 %v169
    %v304 = vpop.f32.mrb[0].mxu0
    %v305 = vadd.f32 %v133, %v304
    %v306 = vpop.f32.mrb[0].mxu0
    %307 = vmatprep.mubr.f32.mxu0 0.0
    %308 = vmatmul.mubr.f32.gmra.mrb[0].mxu0 %v172
    %v309 = vpop.f32.mrb[0].mxu0
    %v310 = vadd.f32 %v133, %v309
    %v311 = vpop.f32.mrb[0].mxu0
    %312 = vmatprep.mubr.f32.mxu0 0.0
    %313 = vmatmul.mubr.f32.gmra.mrb[0].mxu0 %v175
    %v314 = vpop.f32.mrb[0].mxu0
    %v315 = vadd.f32 %v133, %v314
    %v316 = vpop.f32.mrb[0].mxu0
    %317 = vmatprep.mubr.f32.mxu0 0.0
    %318 = vmatmul.mubr.f32.gmra.mrb[0].mxu0 %v178
    %v319 = vpop.f32.mrb[0].mxu0
    %v320 = vadd.f32 %v133, %v319
    %v321 = vpop.f32.mrb[0].mxu0
    %322 = vmatprep.mubr.f32.mxu0 0.0
    %323 = vmatmul.mubr.f32.gmra.mrb[0].mxu0 %v181
    %v324 = vpop.f32.mrb[0].mxu0
    %v325 = vadd.f32 %v133, %v324
    %v326 = vpop.f32.mrb[0].mxu0
    %327 = vdwg.mxu0
    %342 = vrot.lane.b32.xlu0 %v255, 32
    %v343 = vpop.permute.xlu0 %342
    %344 = vrot.lane.b32.xlu0 %v260, 32
    %v345 = vpop.permute.xlu0 %344
    %346 = vrot.lane.b32.xlu0 %v265, 32
    %v347 = vpop.permute.xlu0 %346
    %348 = vrot.lane.b32.xlu0 %v270, 32
    %v349 = vpop.permute.xlu0 %348
    %350 = vrot.lane.b32.xlu0 %v275, 32
    %v351 = vpop.permute.xlu0 %350
    %352 = vrot.lane.b32.xlu0 %v280, 32
    %v353 = vpop.permute.xlu0 %352
    %354 = vrot.lane.b32.xlu0 %v285, 32
    %v355 = vpop.permute.xlu0 %354
    %356 = vrot.lane.b32.xlu0 %v295, 32
    %v357 = vpop.permute.xlu0 %356
    %358 = vrot.lane.b32.xlu0 %v300, 32
    %v359 = vpop.permute.xlu0 %358
    %360 = vrot.lane.b32.xlu0 %v305, 32
    %v361 = vpop.permute.xlu0 %360
    %362 = vrot.lane.b32.xlu0 %v310, 32
    %v363 = vpop.permute.xlu0 %362
    %364 = vrot.lane.b32.xlu0 %v315, 32
    %v365 = vpop.permute.xlu0 %364
    %366 = vrot.lane.b32.xlu0 %v320, 32
    %v367 = vpop.permute.xlu0 %366
    %368 = vrot.lane.b32.xlu0 %v325, 32
    %v369 = vpop.permute.xlu0 %368
    %vm384 = vcmask 261120
    %v385 = vsel %vm384, %v250, %v343
    %v386 = vsel %vm384, %v255, %v345
    %v387 = vsel %vm384, %v260, %v347
    %v388 = vsel %vm384, %v265, %v349
    %v389 = vsel %vm384, %v270, %v351
    %v390 = vsel %vm384, %v275, %v353
    %v391 = vsel %vm384, %v280, %v355
    %v392 = vsel %vm384, %v290, %v357
    %v393 = vsel %vm384, %v295, %v359
    %v394 = vsel %vm384, %v300, %v361
    %v395 = vsel %vm384, %v305, %v363
    %v396 = vsel %vm384, %v310, %v365
    %v397 = vsel %vm384, %v315, %v367
    %v398 = vsel %vm384, %v320, %v369
    %v399 = vld [vmem:[#allocation2 + $0x8] sm:$0xff]
    %v400 = vld [vmem:[#allocation2 + $0x10] sm:$0xff]
    %v401 = vld [vmem:[#allocation2 + $0x18] sm:$0xff]
    %v402 = vld [vmem:[#allocation2 + $0x20] sm:$0xff]
    %v403 = vld [vmem:[#allocation2 + $0x28] sm:$0xff]
    %v404 = vld [vmem:[#allocation2 + $0x30] sm:$0xff]
    %v405 = vld [vmem:[#allocation2 + $0x38] sm:$0xff]
    %v406 = vld [vmem:[#allocation2 + $0x40] sm:$0xff]
    %v407 = vld [vmem:[#allocation2 + $0x111] sm:$0x1]
    %v408 = vlaneseq
    %v409 = vshrl.u32 %v408, 7
    %v410 = vsub.s32 0, %v409
    %v411 = vrot.slane %v407, %v410
    %vm412 = vcmask 523264
    %v414 = vsel %vm412, %v385, 0
    %v417 = vsel %vm412, %v386, 0
    %v420 = vsel %vm412, %v387, 0
    %v423 = vsel %vm412, %v388, 0
    %v426 = vsel %vm412, %v389, 0
    %v429 = vsel %vm412, %v390, 0
    %v432 = vsel %vm412, %v391, 0
    %v435 = vsel %vm412, %v392, 0
    %v438 = vsel %vm412, %v393, 0
    %v441 = vsel %vm412, %v394, 0
    %v444 = vsel %vm412, %v395, 0
    %v447 = vsel %vm412, %v396, 0
    %v450 = vsel %vm412, %v397, 0
    %v453 = vsel %vm412, %v398, 0
    %455 = vmatprep.subr.mxu0 0.0
    %456 = vmatpush1.msra.mxu0 %v399
    %457 = vmatprep.subr.mxu0 0.0
    %458 = vmatpush1.msra.mxu0 %v400
    %459 = vmatprep.subr.mxu0 0.0
    %460 = vmatpush1.msra.mxu0 %v401
    %461 = vmatprep.subr.mxu0 0.0
    %462 = vmatpush1.msra.mxu0 %v402
    %463 = vmatprep.subr.mxu0 0.0
    %464 = vmatpush1.msra.mxu0 %v403
    %465 = vmatprep.subr.mxu0 0.0
    %466 = vmatpush1.msra.mxu0 %v404
    %467 = vmatprep.subr.mxu0 0.0
    %468 = vmatpush1.msra.mxu0 %v405
    %469 = vmatprep.subr.mxu0 0.0
    %470 = vmatpush1.msra.mxu0 %v406
    %471 = vmatprep.subr.mxu0 0.0
    %472 = vmatpush1.msra.mxu0 0.0
    %473 = vmatprep.subr.mxu0 0.0
    %474 = vmatpush1.msra.mxu0 0.0
    %475 = vmatprep.subr.mxu0 0.0
    %476 = vmatpush1.msra.mxu0 0.0
    %477 = vmatprep.subr.mxu0 0.0
    %478 = vmatpush1.msra.mxu0 0.0
    %479 = vmatprep.subr.mxu0 0.0
    %480 = vmatpush1.msra.mxu0 0.0
    %481 = vmatprep.subr.mxu0 0.0
    %482 = vmatpush1.msra.mxu0 0.0
    %483 = vmatprep.subr.mxu0 0.0
    %484 = vmatpush1.msra.mxu0 0.0
    %485 = vmatprep.subr.mxu0 0.0
    %486 = vmatpush1.msra.mxu0 0.0
    %487 = vmatprep.subr.mxu0 0.0
    %488 = vmatpush1.msra.mxu0 0.0
    %489 = vmatprep.subr.mxu0 0.0
    %490 = vmatpush1.msra.mxu0 0.0
    %491 = vmatprep.subr.mxu0 0.0
    %492 = vmatpush1.msra.mxu0 0.0
    %493 = vmatprep.subr.mxu0 0.0
    %494 = vmatpush1.msra.mxu0 0.0
    %495 = vmatprep.subr.mxu0 0.0
    %496 = vmatpush1.msra.mxu0 0.0
    %497 = vmatprep.subr.mxu0 0.0
    %498 = vmatpush1.msra.mxu0 0.0
    %499 = vmatprep.subr.mxu0 0.0
    %500 = vmatpush1.msra.mxu0 0.0
    %501 = vmatprep.subr.mxu0 0.0
    %502 = vmatpush1.msra.mxu0 0.0
    %503 = vmatprep.subr.mxu0 0.0
    %504 = vmatpush1.msra.mxu0 0.0
    %505 = vmatprep.subr.mxu0 0.0
    %506 = vmatpush1.msra.mxu0 0.0
    %507 = vmatprep.subr.mxu0 0.0
    %508 = vmatpush1.msra.mxu0 0.0
    %509 = vmatprep.subr.mxu0 0.0
    %510 = vmatpush1.msra.mxu0 0.0
    %511 = vmatprep.subr.mxu0 0.0
    %512 = vmatpush1.msra.mxu0 0.0
    %513 = vmatprep.subr.mxu0 0.0
    %514 = vmatpush1.msra.mxu0 0.0
    %515 = vmatprep.subr.mxu0 0.0
    %516 = vmatpush1.msra.mxu0 0.0
    %517 = vmatprep.subr.mxu0 0.0
    %518 = vmatpush1.msra.mxu0 0.0
    %519 = vmatprep.mubr.f32.mxu0 0.0
    %520 = vmatmul.mubr.f32.gmra.mrb[0].mxu0 %v414
    %v521 = vpop.f32.mrb[0].mxu0
    %v522 = vadd.f32 %v411, %v521
    %v523 = vpop.f32.mrb[0].mxu0
    %524 = vmatprep.mubr.f32.mxu0 0.0
    %525 = vmatmul.mubr.f32.gmra.mrb[0].mxu0 %v417
    %v526 = vpop.f32.mrb[0].mxu0
    %v527 = vadd.f32 %v411, %v526
    %v528 = vpop.f32.mrb[0].mxu0
    %529 = vmatprep.mubr.f32.mxu0 0.0
    %530 = vmatmul.mubr.f32.gmra.mrb[0].mxu0 %v420
    %v531 = vpop.f32.mrb[0].mxu0
    %v532 = vadd.f32 %v411, %v531
    %v533 = vpop.f32.mrb[0].mxu0
    %534 = vmatprep.mubr.f32.mxu0 0.0
    %535 = vmatmul.mubr.f32.gmra.mrb[0].mxu0 %v423
    %v536 = vpop.f32.mrb[0].mxu0
    %v537 = vadd.f32 %v411, %v536
    %v538 = vpop.f32.mrb[0].mxu0
    %539 = vmatprep.mubr.f32.mxu0 0.0
    %540 = vmatmul.mubr.f32.gmra.mrb[0].mxu0 %v426
    %v541 = vpop.f32.mrb[0].mxu0
    %v542 = vadd.f32 %v411, %v541
    %v543 = vpop.f32.mrb[0].mxu0
    %544 = vmatprep.mubr.f32.mxu0 0.0
    %545 = vmatmul.mubr.f32.gmra.mrb[0].mxu0 %v429
    %v546 = vpop.f32.mrb[0].mxu0
    %v547 = vadd.f32 %v411, %v546
    %v548 = vpop.f32.mrb[0].mxu0
    %549 = vmatprep.mubr.f32.mxu0 0.0
    %550 = vmatmul.mubr.f32.gmra.mrb[0].mxu0 %v432
    %v551 = vpop.f32.mrb[0].mxu0
    %v552 = vadd.f32 %v411, %v551
    %v553 = vpop.f32.mrb[0].mxu0
    %554 = vmatprep.mubr.f32.mxu0 0.0
    %555 = vmatmul.mubr.f32.gmra.mrb[0].mxu0 %v435
    %v556 = vpop.f32.mrb[0].mxu0
    %v557 = vadd.f32 %v411, %v556
    %v558 = vpop.f32.mrb[0].mxu0
    %559 = vmatprep.mubr.f32.mxu0 0.0
    %560 = vmatmul.mubr.f32.gmra.mrb[0].mxu0 %v438
    %v561 = vpop.f32.mrb[0].mxu0
    %v562 = vadd.f32 %v411, %v561
    %v563 = vpop.f32.mrb[0].mxu0
    %564 = vmatprep.mubr.f32.mxu0 0.0
    %565 = vmatmul.mubr.f32.gmra.mrb[0].mxu0 %v441
    %v566 = vpop.f32.mrb[0].mxu0
    %v567 = vadd.f32 %v411, %v566
    %v568 = vpop.f32.mrb[0].mxu0
    %569 = vmatprep.mubr.f32.mxu0 0.0
    %570 = vmatmul.mubr.f32.gmra.mrb[0].mxu0 %v444
    %v571 = vpop.f32.mrb[0].mxu0
    %v572 = vadd.f32 %v411, %v571
    %v573 = vpop.f32.mrb[0].mxu0
    %574 = vmatprep.mubr.f32.mxu0 0.0
    %575 = vmatmul.mubr.f32.gmra.mrb[0].mxu0 %v447
    %v576 = vpop.f32.mrb[0].mxu0
    %v577 = vadd.f32 %v411, %v576
    %v578 = vpop.f32.mrb[0].mxu0
    %579 = vmatprep.mubr.f32.mxu0 0.0
    %580 = vmatmul.mubr.f32.gmra.mrb[0].mxu0 %v450
    %v581 = vpop.f32.mrb[0].mxu0
    %v582 = vadd.f32 %v411, %v581
    %v583 = vpop.f32.mrb[0].mxu0
    %584 = vmatprep.mubr.f32.mxu0 0.0
    %585 = vmatmul.mubr.f32.gmra.mrb[0].mxu0 %v453
    %v586 = vpop.f32.mrb[0].mxu0
    %v587 = vadd.f32 %v411, %v586
    %v588 = vpop.f32.mrb[0].mxu0
    %589 = vdwg.mxu0
    %600 = vrot.lane.b32.xlu0 %v532, 32
    %v601 = vpop.permute.xlu0 %600
    %602 = vrot.lane.b32.xlu0 %v537, 32
    %v603 = vpop.permute.xlu0 %602
    %604 = vrot.lane.b32.xlu0 %v542, 32
    %v605 = vpop.permute.xlu0 %604
    %606 = vrot.lane.b32.xlu0 %v547, 32
    %v607 = vpop.permute.xlu0 %606
    %608 = vrot.lane.b32.xlu0 %v552, 32
    %v609 = vpop.permute.xlu0 %608
    %610 = vrot.lane.b32.xlu0 %v567, 32
    %v611 = vpop.permute.xlu0 %610
    %612 = vrot.lane.b32.xlu0 %v572, 32
    %v613 = vpop.permute.xlu0 %612
    %614 = vrot.lane.b32.xlu0 %v577, 32
    %v615 = vpop.permute.xlu0 %614
    %616 = vrot.lane.b32.xlu0 %v582, 32
    %v617 = vpop.permute.xlu0 %616
    %618 = vrot.lane.b32.xlu0 %v587, 32
    %v619 = vpop.permute.xlu0 %618
    %v630 = vsel %vm384, %v522, %v601
    %v631 = vsel %vm384, %v527, %v603
    %v632 = vsel %vm384, %v532, %v605
    %v633 = vsel %vm384, %v537, %v607
    %v634 = vsel %vm384, %v542, %v609
    %v635 = vsel %vm384, %v557, %v611
    %v636 = vsel %vm384, %v562, %v613
    %v637 = vsel %vm384, %v567, %v615
    %v638 = vsel %vm384, %v572, %v617
    %v639 = vsel %vm384, %v577, %v619
    %v640 = vld [vmem:[#allocation2 + $0x48] sm:$0xff]
    %v641 = vld [vmem:[#allocation2 + $0x50] sm:$0xff]
    %v642 = vld [vmem:[#allocation2 + $0x58] sm:$0xff]
    %v643 = vld [vmem:[#allocation2 + $0x60] sm:$0xff]
    %v644 = vld [vmem:[#allocation2 + $0x68] sm:$0xff]
    %v645 = vld [vmem:[#allocation2 + $0x70] sm:$0xff]
    %v646 = vld [vmem:[#allocation2 + $0x78] sm:$0xff]
    %v647 = vld [vmem:[#allocation2 + $0x80] sm:$0xff]
    %v648 = vld [vmem:[#allocation2 + $0x112] sm:$0x1]
    %v649 = vlaneseq
    %v650 = vshrl.u32 %v649, 7
    %v651 = vsub.s32 0, %v650
    %v652 = vrot.slane %v648, %v651
    %v654 = vsel %vm412, %v630, 0
    %v657 = vsel %vm412, %v631, 0
    %v660 = vsel %vm412, %v632, 0
    %v663 = vsel %vm412, %v633, 0
    %v666 = vsel %vm412, %v634, 0
    %v669 = vsel %vm412, %v635, 0
    %v672 = vsel %vm412, %v636, 0
    %v675 = vsel %vm412, %v637, 0
    %v678 = vsel %vm412, %v638, 0
    %v681 = vsel %vm412, %v639, 0
    %683 = vmatprep.subr.mxu0 0.0
    %684 = vmatpush1.msra.mxu0 %v640
    %685 = vmatprep.subr.mxu0 0.0
    %686 = vmatpush1.msra.mxu0 %v641
    %687 = vmatprep.subr.mxu0 0.0
    %688 = vmatpush1.msra.mxu0 %v642
    %689 = vmatprep.subr.mxu0 0.0
    %690 = vmatpush1.msra.mxu0 %v643
    %691 = vmatprep.subr.mxu0 0.0
    %692 = vmatpush1.msra.mxu0 %v644
    %693 = vmatprep.subr.mxu0 0.0
    %694 = vmatpush1.msra.mxu0 %v645
    %695 = vmatprep.subr.mxu0 0.0
    %696 = vmatpush1.msra.mxu0 %v646
    %697 = vmatprep.subr.mxu0 0.0
    %698 = vmatpush1.msra.mxu0 %v647
    %699 = vmatprep.subr.mxu0 0.0
    %700 = vmatpush1.msra.mxu0 0.0
    %701 = vmatprep.subr.mxu0 0.0
    %702 = vmatpush1.msra.mxu0 0.0
    %703 = vmatprep.subr.mxu0 0.0
    %704 = vmatpush1.msra.mxu0 0.0
    %705 = vmatprep.subr.mxu0 0.0
    %706 = vmatpush1.msra.mxu0 0.0
    %707 = vmatprep.subr.mxu0 0.0
    %708 = vmatpush1.msra.mxu0 0.0
    %709 = vmatprep.subr.mxu0 0.0
    %710 = vmatpush1.msra.mxu0 0.0
    %711 = vmatprep.subr.mxu0 0.0
    %712 = vmatpush1.msra.mxu0 0.0
    %713 = vmatprep.subr.mxu0 0.0
    %714 = vmatpush1.msra.mxu0 0.0
    %715 = vmatprep.subr.mxu0 0.0
    %716 = vmatpush1.msra.mxu0 0.0
    %717 = vmatprep.subr.mxu0 0.0
    %718 = vmatpush1.msra.mxu0 0.0
    %719 = vmatprep.subr.mxu0 0.0
    %720 = vmatpush1.msra.mxu0 0.0
    %721 = vmatprep.subr.mxu0 0.0
    %722 = vmatpush1.msra.mxu0 0.0
    %723 = vmatprep.subr.mxu0 0.0
    %724 = vmatpush1.msra.mxu0 0.0
    %725 = vmatprep.subr.mxu0 0.0
    %726 = vmatpush1.msra.mxu0 0.0
    %727 = vmatprep.subr.mxu0 0.0
    %728 = vmatpush1.msra.mxu0 0.0
    %729 = vmatprep.subr.mxu0 0.0
    %730 = vmatpush1.msra.mxu0 0.0
    %731 = vmatprep.subr.mxu0 0.0
    %732 = vmatpush1.msra.mxu0 0.0
    %733 = vmatprep.subr.mxu0 0.0
    %734 = vmatpush1.msra.mxu0 0.0
    %735 = vmatprep.subr.mxu0 0.0
    %736 = vmatpush1.msra.mxu0 0.0
    %737 = vmatprep.subr.mxu0 0.0
    %738 = vmatpush1.msra.mxu0 0.0
    %739 = vmatprep.subr.mxu0 0.0
    %740 = vmatpush1.msra.mxu0 0.0
    %741 = vmatprep.subr.mxu0 0.0
    %742 = vmatpush1.msra.mxu0 0.0
    %743 = vmatprep.subr.mxu0 0.0
    %744 = vmatpush1.msra.mxu0 0.0
    %745 = vmatprep.subr.mxu0 0.0
    %746 = vmatpush1.msra.mxu0 0.0
    %747 = vmatprep.mubr.f32.mxu0 0.0
    %748 = vmatmul.mubr.f32.gmra.mrb[0].mxu0 %v654
    %v749 = vpop.f32.mrb[0].mxu0
    %v750 = vadd.f32 %v652, %v749
    %v751 = vpop.f32.mrb[0].mxu0
    %752 = vmatprep.mubr.f32.mxu0 0.0
    %753 = vmatmul.mubr.f32.gmra.mrb[0].mxu0 %v657
    %v754 = vpop.f32.mrb[0].mxu0
    %v755 = vpop.f32.mrb[0].mxu0
    %756 = vmatprep.mubr.f32.mxu0 0.0
    %757 = vmatmul.mubr.f32.gmra.mrb[0].mxu0 %v660
    %v758 = vpop.f32.mrb[0].mxu0
    %v759 = vpop.f32.mrb[0].mxu0
    %760 = vmatprep.mubr.f32.mxu0 0.0
    %761 = vmatmul.mubr.f32.gmra.mrb[0].mxu0 %v663
    %v762 = vpop.f32.mrb[0].mxu0
    %v763 = vpop.f32.mrb[0].mxu0
    %764 = vmatprep.mubr.f32.mxu0 0.0
    %765 = vmatmul.mubr.f32.gmra.mrb[0].mxu0 %v666
    %v766 = vpop.f32.mrb[0].mxu0
    %v767 = vadd.f32 %v652, %v766
    %v768 = vpop.f32.mrb[0].mxu0
    %769 = vmatprep.mubr.f32.mxu0 0.0
    %770 = vmatmul.mubr.f32.gmra.mrb[0].mxu0 %v669
    %v771 = vpop.f32.mrb[0].mxu0
    %v772 = vadd.f32 %v652, %v771
    %v773 = vpop.f32.mrb[0].mxu0
    %774 = vmatprep.mubr.f32.mxu0 0.0
    %775 = vmatmul.mubr.f32.gmra.mrb[0].mxu0 %v672
    %v776 = vpop.f32.mrb[0].mxu0
    %v777 = vpop.f32.mrb[0].mxu0
    %778 = vmatprep.mubr.f32.mxu0 0.0
    %779 = vmatmul.mubr.f32.gmra.mrb[0].mxu0 %v675
    %v780 = vpop.f32.mrb[0].mxu0
    %v781 = vpop.f32.mrb[0].mxu0
    %782 = vmatprep.mubr.f32.mxu0 0.0
    %783 = vmatmul.mubr.f32.gmra.mrb[0].mxu0 %v678
    %v784 = vpop.f32.mrb[0].mxu0
    %v785 = vpop.f32.mrb[0].mxu0
    %786 = vmatprep.mubr.f32.mxu0 0.0
    %787 = vmatmul.mubr.f32.gmra.mrb[0].mxu0 %v681
    %v788 = vpop.f32.mrb[0].mxu0
    %v789 = vadd.f32 %v652, %v788
    %v790 = vpop.f32.mrb[0].mxu0
    %791 = vdwg.mxu0
    %794 = vrot.lane.b32.xlu0 %v767, 32
    %v795 = vpop.permute.xlu0 %794
    %796 = vrot.lane.b32.xlu0 %v789, 32
    %v797 = vpop.permute.xlu0 %796
    %v800 = vsel %vm384, %v750, %v795
    %v801 = vsel %vm384, %v772, %v797
    %v802 = vld [vmem:[#allocation2 + $0x88] sm:$0xff]
    %v803 = vld [vmem:[#allocation2 + $0x90] sm:$0xff]
    %v804 = vld [vmem:[#allocation2 + $0x98] sm:$0xff]
    %v805 = vld [vmem:[#allocation2 + $0xa0] sm:$0xff]
    %v806 = vld [vmem:[#allocation2 + $0xa8] sm:$0xff]
    %v807 = vld [vmem:[#allocation2 + $0xb0] sm:$0xff]
    %v808 = vld [vmem:[#allocation2 + $0xb8] sm:$0xff]
    %v809 = vld [vmem:[#allocation2 + $0xc0] sm:$0xff]
    %v810 = vld [vmem:[#allocation2 + $0x113] sm:$0x1]
    %v811 = vlaneseq
    %v812 = vshrl.u32 %v811, 7
    %v813 = vsub.s32 0, %v812
    %v814 = vrot.slane %v810, %v813
    %v816 = vsel %vm412, %v800, 0
    %v819 = vsel %vm412, %v801, 0
    %821 = vmatprep.subr.mxu0 0.0
    %822 = vmatpush1.msra.mxu0 %v802
    %823 = vmatprep.subr.mxu0 0.0
    %824 = vmatpush1.msra.mxu0 %v803
    %825 = vmatprep.subr.mxu0 0.0
    %826 = vmatpush1.msra.mxu0 %v804
    %827 = vmatprep.subr.mxu0 0.0
    %828 = vmatpush1.msra.mxu0 %v805
    %829 = vmatprep.subr.mxu0 0.0
    %830 = vmatpush1.msra.mxu0 %v806
    %831 = vmatprep.subr.mxu0 0.0
    %832 = vmatpush1.msra.mxu0 %v807
    %833 = vmatprep.subr.mxu0 0.0
    %834 = vmatpush1.msra.mxu0 %v808
    %835 = vmatprep.subr.mxu0 0.0
    %836 = vmatpush1.msra.mxu0 %v809
    %837 = vmatprep.subr.mxu0 0.0
    %838 = vmatpush1.msra.mxu0 0.0
    %839 = vmatprep.subr.mxu0 0.0
    %840 = vmatpush1.msra.mxu0 0.0
    %841 = vmatprep.subr.mxu0 0.0
    %842 = vmatpush1.msra.mxu0 0.0
    %843 = vmatprep.subr.mxu0 0.0
    %844 = vmatpush1.msra.mxu0 0.0
    %845 = vmatprep.subr.mxu0 0.0
    %846 = vmatpush1.msra.mxu0 0.0
    %847 = vmatprep.subr.mxu0 0.0
    %848 = vmatpush1.msra.mxu0 0.0
    %849 = vmatprep.subr.mxu0 0.0
    %850 = vmatpush1.msra.mxu0 0.0
    %851 = vmatprep.subr.mxu0 0.0
    %852 = vmatpush1.msra.mxu0 0.0
    %853 = vmatprep.subr.mxu0 0.0
    %854 = vmatpush1.msra.mxu0 0.0
    %855 = vmatprep.subr.mxu0 0.0
    %856 = vmatpush1.msra.mxu0 0.0
    %857 = vmatprep.subr.mxu0 0.0
    %858 = vmatpush1.msra.mxu0 0.0
    %859 = vmatprep.subr.mxu0 0.0
    %860 = vmatpush1.msra.mxu0 0.0
    %861 = vmatprep.subr.mxu0 0.0
    %862 = vmatpush1.msra.mxu0 0.0
    %863 = vmatprep.subr.mxu0 0.0
    %864 = vmatpush1.msra.mxu0 0.0
    %865 = vmatprep.subr.mxu0 0.0
    %866 = vmatpush1.msra.mxu0 0.0
    %867 = vmatprep.subr.mxu0 0.0
    %868 = vmatpush1.msra.mxu0 0.0
    %869 = vmatprep.subr.mxu0 0.0
    %870 = vmatpush1.msra.mxu0 0.0
    %871 = vmatprep.subr.mxu0 0.0
    %872 = vmatpush1.msra.mxu0 0.0
    %873 = vmatprep.subr.mxu0 0.0
    %874 = vmatpush1.msra.mxu0 0.0
    %875 = vmatprep.subr.mxu0 0.0
    %876 = vmatpush1.msra.mxu0 0.0
    %877 = vmatprep.subr.mxu0 0.0
    %878 = vmatpush1.msra.mxu0 0.0
    %879 = vmatprep.subr.mxu0 0.0
    %880 = vmatpush1.msra.mxu0 0.0
    %881 = vmatprep.subr.mxu0 0.0
    %882 = vmatpush1.msra.mxu0 0.0
    %883 = vmatprep.subr.mxu0 0.0
    %884 = vmatpush1.msra.mxu0 0.0
    %885 = vmatprep.mubr.f32.mxu0 0.0
    %886 = vmatmul.mubr.f32.gmra.mrb[0].mxu0 %v816
    %v887 = vpop.f32.mrb[0].mxu0
    %v888 = vadd.f32 %v814, %v887
    %v889 = vpop.f32.mrb[0].mxu0
    %890 = vmatprep.mubr.f32.mxu0 0.0
    %891 = vmatmul.mubr.f32.gmra.mrb[0].mxu0 %v819
    %v892 = vpop.f32.mrb[0].mxu0
    %v893 = vadd.f32 %v814, %v892
    %v894 = vpop.f32.mrb[0].mxu0
    %895 = vdwg.mxu0
    %v896 = vld [vmem:[#allocation2 + $0xc8] sm:$0xff]
    %v897 = vld [vmem:[#allocation2 + $0xd0] sm:$0xff]
    %v898 = vld [vmem:[#allocation2 + $0xd8] sm:$0xff]
    %v899 = vld [vmem:[#allocation2 + $0xe0] sm:$0xff]
    %v900 = vld [vmem:[#allocation2 + $0x114] sm:$0x1]
    %v901 = vlaneseq
    %v902 = vshrl.u32 %v901, 7
    %v903 = vsub.s32 0, %v902
    %v904 = vrot.slane %v900, %v903
    %v906 = vsel %vm384, %v888, 0
    %v909 = vsel %vm384, %v893, 0
    %911 = vmatprep.subr.mxu0 0.0
    %912 = vmatpush1.msra.mxu0 %v896
    %913 = vmatprep.subr.mxu0 0.0
    %914 = vmatpush1.msra.mxu0 %v897
    %915 = vmatprep.subr.mxu0 0.0
    %916 = vmatpush1.msra.mxu0 %v898
    %917 = vmatprep.subr.mxu0 0.0
    %918 = vmatpush1.msra.mxu0 %v899
    %919 = vmatprep.subr.mxu0 0.0
    %920 = vmatpush1.msra.mxu0 0.0
    %921 = vmatprep.subr.mxu0 0.0
    %922 = vmatpush1.msra.mxu0 0.0
    %923 = vmatprep.subr.mxu0 0.0
    %924 = vmatpush1.msra.mxu0 0.0
    %925 = vmatprep.subr.mxu0 0.0
    %926 = vmatpush1.msra.mxu0 0.0
    %927 = vmatprep.subr.mxu0 0.0
    %928 = vmatpush1.msra.mxu0 0.0
    %929 = vmatprep.subr.mxu0 0.0
    %930 = vmatpush1.msra.mxu0 0.0
    %931 = vmatprep.subr.mxu0 0.0
    %932 = vmatpush1.msra.mxu0 0.0
    %933 = vmatprep.subr.mxu0 0.0
    %934 = vmatpush1.msra.mxu0 0.0
    %935 = vmatprep.subr.mxu0 0.0
    %936 = vmatpush1.msra.mxu0 0.0
    %937 = vmatprep.subr.mxu0 0.0
    %938 = vmatpush1.msra.mxu0 0.0
    %939 = vmatprep.subr.mxu0 0.0
    %940 = vmatpush1.msra.mxu0 0.0
    %941 = vmatprep.subr.mxu0 0.0
    %942 = vmatpush1.msra.mxu0 0.0
    %943 = vmatprep.subr.mxu0 0.0
    %944 = vmatpush1.msra.mxu0 0.0
    %945 = vmatprep.subr.mxu0 0.0
    %946 = vmatpush1.msra.mxu0 0.0
    %947 = vmatprep.subr.mxu0 0.0
    %948 = vmatpush1.msra.mxu0 0.0
    %949 = vmatprep.subr.mxu0 0.0
    %950 = vmatpush1.msra.mxu0 0.0
    %951 = vmatprep.subr.mxu0 0.0
    %952 = vmatpush1.msra.mxu0 0.0
    %953 = vmatprep.subr.mxu0 0.0
    %954 = vmatpush1.msra.mxu0 0.0
    %955 = vmatprep.subr.mxu0 0.0
    %956 = vmatpush1.msra.mxu0 0.0
    %957 = vmatprep.subr.mxu0 0.0
    %958 = vmatpush1.msra.mxu0 0.0
    %959 = vmatprep.subr.mxu0 0.0
    %960 = vmatpush1.msra.mxu0 0.0
    %961 = vmatprep.subr.mxu0 0.0
    %962 = vmatpush1.msra.mxu0 0.0
    %963 = vmatprep.subr.mxu0 0.0
    %964 = vmatpush1.msra.mxu0 0.0
    %965 = vmatprep.subr.mxu0 0.0
    %966 = vmatpush1.msra.mxu0 0.0
    %967 = vmatprep.subr.mxu0 0.0
    %968 = vmatpush1.msra.mxu0 0.0
    %969 = vmatprep.subr.mxu0 0.0
    %970 = vmatpush1.msra.mxu0 0.0
    %971 = vmatprep.subr.mxu0 0.0
    %972 = vmatpush1.msra.mxu0 0.0
    %973 = vmatprep.subr.mxu0 0.0
    %974 = vmatpush1.msra.mxu0 0.0
    %975 = vmatprep.mubr.f32.mxu0 0.0
    %976 = vmatmul.mubr.f32.gmra.mrb[0].mxu0 %v906
    %v977 = vpop.f32.mrb[0].mxu0
    %v978 = vadd.f32 %v904, %v977
    %v979 = vpop.f32.mrb[0].mxu0
    %980 = vmatprep.mubr.f32.mxu0 0.0
    %981 = vmatmul.mubr.f32.gmra.mrb[0].mxu0 %v909
    %v982 = vpop.f32.mrb[0].mxu0
    %v983 = vadd.f32 %v904, %v982
    %v984 = vpop.f32.mrb[0].mxu0
    %985 = vdwg.mxu0
    %v986 = vmax.f32 %v978, 0.0
    %v987 = vmax.f32 %v983, 0.0
    %v988 = vld [vmem:[#allocation2 + $0xe8] sm:$0xff]
    %v989 = vld [vmem:[#allocation2 + $0xf0] sm:$0xff]
    %v990 = vld [vmem:[#allocation2 + $0xf8] sm:$0xff]
    %v991 = vld [vmem:[#allocation2 + $0x100] sm:$0xff]
    %v992 = vld [vmem:[#allocation2 + $0x115] sm:$0x1]
    %v993 = vlaneseq
    %v994 = vshrl.u32 %v993, 7
    %v995 = vsub.s32 0, %v994
    %v996 = vrot.slane %v992, %v995
    %v998 = vsel %vm384, %v986, 0
    %v1001 = vsel %vm384, %v987, 0
    %1003 = vmatprep.subr.mxu0 0.0
    %1004 = vmatpush1.msra.mxu0 %v988
    %1005 = vmatprep.subr.mxu0 0.0
    %1006 = vmatpush1.msra.mxu0 %v989
    %1007 = vmatprep.subr.mxu0 0.0
    %1008 = vmatpush1.msra.mxu0 %v990
    %1009 = vmatprep.subr.mxu0 0.0
    %1010 = vmatpush1.msra.mxu0 %v991
    %1011 = vmatprep.subr.mxu0 0.0
    %1012 = vmatpush1.msra.mxu0 0.0
    %1013 = vmatprep.subr.mxu0 0.0
    %1014 = vmatpush1.msra.mxu0 0.0
    %1015 = vmatprep.subr.mxu0 0.0
    %1016 = vmatpush1.msra.mxu0 0.0
    %1017 = vmatprep.subr.mxu0 0.0
    %1018 = vmatpush1.msra.mxu0 0.0
    %1019 = vmatprep.subr.mxu0 0.0
    %1020 = vmatpush1.msra.mxu0 0.0
    %1021 = vmatprep.subr.mxu0 0.0
    %1022 = vmatpush1.msra.mxu0 0.0
    %1023 = vmatprep.subr.mxu0 0.0
    %1024 = vmatpush1.msra.mxu0 0.0
    %1025 = vmatprep.subr.mxu0 0.0
    %1026 = vmatpush1.msra.mxu0 0.0
    %1027 = vmatprep.subr.mxu0 0.0
    %1028 = vmatpush1.msra.mxu0 0.0
    %1029 = vmatprep.subr.mxu0 0.0
    %1030 = vmatpush1.msra.mxu0 0.0
    %1031 = vmatprep.subr.mxu0 0.0
    %1032 = vmatpush1.msra.mxu0 0.0
    %1033 = vmatprep.subr.mxu0 0.0
    %1034 = vmatpush1.msra.mxu0 0.0
    %1035 = vmatprep.subr.mxu0 0.0
    %1036 = vmatpush1.msra.mxu0 0.0
    %1037 = vmatprep.subr.mxu0 0.0
    %1038 = vmatpush1.msra.mxu0 0.0
    %1039 = vmatprep.subr.mxu0 0.0
    %1040 = vmatpush1.msra.mxu0 0.0
    %1041 = vmatprep.subr.mxu0 0.0
    %1042 = vmatpush1.msra.mxu0 0.0
    %1043 = vmatprep.subr.mxu0 0.0
    %1044 = vmatpush1.msra.mxu0 0.0
    %1045 = vmatprep.subr.mxu0 0.0
    %1046 = vmatpush1.msra.mxu0 0.0
    %1047 = vmatprep.subr.mxu0 0.0
    %1048 = vmatpush1.msra.mxu0 0.0
    %1049 = vmatprep.subr.mxu0 0.0
    %1050 = vmatpush1.msra.mxu0 0.0
    %1051 = vmatprep.subr.mxu0 0.0
    %1052 = vmatpush1.msra.mxu0 0.0
    %1053 = vmatprep.subr.mxu0 0.0
    %1054 = vmatpush1.msra.mxu0 0.0
    %1055 = vmatprep.subr.mxu0 0.0
    %1056 = vmatpush1.msra.mxu0 0.0
    %1057 = vmatprep.subr.mxu0 0.0
    %1058 = vmatpush1.msra.mxu0 0.0
    %1059 = vmatprep.subr.mxu0 0.0
    %1060 = vmatpush1.msra.mxu0 0.0
    %1061 = vmatprep.subr.mxu0 0.0
    %1062 = vmatpush1.msra.mxu0 0.0
    %1063 = vmatprep.subr.mxu0 0.0
    %1064 = vmatpush1.msra.mxu0 0.0
    %1065 = vmatprep.subr.mxu0 0.0
    %1066 = vmatpush1.msra.mxu0 0.0
    %1067 = vmatprep.mubr.f32.mxu0 0.0
    %1068 = vmatmul.mubr.f32.gmra.mrb[0].mxu0 %v998
    %v1069 = vpop.f32.mrb[0].mxu0
    %v1070 = vadd.f32 %v996, %v1069
    %v1071 = vpop.f32.mrb[0].mxu0
    %1072 = vmatprep.mubr.f32.mxu0 0.0
    %1073 = vmatmul.mubr.f32.gmra.mrb[0].mxu0 %v1001
    %v1074 = vpop.f32.mrb[0].mxu0
    %v1075 = vadd.f32 %v996, %v1074
    %v1076 = vpop.f32.mrb[0].mxu0
    %1077 = vdwg.mxu0
    %v1078 = vld [vmem:[%s1] sm:$0xff]
    %v1079 = vld [vmem:[#allocation2 + $0x116] sm:$0x1]
    %v1080 = vlaneseq
    %v1081 = vshrl.u32 %v1080, 7
    %v1082 = vsub.s32 0, %v1081
    %v1083 = vrot.slane %v1079, %v1082
    %v1084 = vld [vmem:[#allocation2 + $0x108] sm:$0xff]
    %v1085 = vld [vmem:[#allocation2 + $0x117] sm:$0x1]
    %1087 = vrot.lane.b32.xlu0 %v1079, 96
    %v1088 = vpop.permute.xlu0 %1087
    %s1089 = vtos %v1088
    %v1090 = vstv %s1089
    %v1093 = vsel %vm384, %v1083, 0
    %v1096 = vsel %vm384, %v1070, 0
    %1098 = vmatprep.subr.mxu0 0.0
    %1099 = vmatpush1.xpose.msra.mxu0 %v1096
    %1100 = vmatprep.subr.mxu0 0.0
    %1101 = vmatpush1.xpose.msra.mxu0 0.0
    %1102 = vmatprep.subr.mxu0 0.0
    %1103 = vmatpush1.xpose.msra.mxu0 0.0
    %1104 = vmatprep.subr.mxu0 0.0
    %1105 = vmatpush1.xpose.msra.mxu0 0.0
    %1106 = vmatprep.subr.mxu0 0.0
    %1107 = vmatpush1.xpose.msra.mxu0 0.0
    %1108 = vmatprep.subr.mxu0 0.0
    %1109 = vmatpush1.xpose.msra.mxu0 0.0
    %1110 = vmatprep.subr.mxu0 0.0
    %1111 = vmatpush1.xpose.msra.mxu0 0.0
    %1112 = vmatprep.subr.mxu0 0.0
    %1113 = vmatpush1.xpose.msra.mxu0 0.0
    %1114 = vmatprep.subr.mxu0 0.0
    %1115 = vmatpush1.xpose.msra.mxu0 0.0
    %1116 = vmatprep.subr.mxu0 0.0
    %1117 = vmatpush1.xpose.msra.mxu0 0.0
    %1118 = vmatprep.subr.mxu0 0.0
    %1119 = vmatpush1.xpose.msra.mxu0 0.0
    %1120 = vmatprep.subr.mxu0 0.0
    %1121 = vmatpush1.xpose.msra.mxu0 0.0
    %1122 = vmatprep.subr.mxu0 0.0
    %1123 = vmatpush1.xpose.msra.mxu0 0.0
    %1124 = vmatprep.subr.mxu0 0.0
    %1125 = vmatpush1.xpose.msra.mxu0 0.0
    %1126 = vmatprep.subr.mxu0 0.0
    %1127 = vmatpush1.xpose.msra.mxu0 0.0
    %1128 = vmatprep.subr.mxu0 0.0
    %1129 = vmatpush1.xpose.msra.mxu0 0.0
    %1130 = vmatprep.subr.mxu0 0.0
    %1131 = vmatpush1.xpose.msra.mxu0 0.0
    %1132 = vmatprep.subr.mxu0 0.0
    %1133 = vmatpush1.xpose.msra.mxu0 0.0
    %1134 = vmatprep.subr.mxu0 0.0
    %1135 = vmatpush1.xpose.msra.mxu0 0.0
    %1136 = vmatprep.subr.mxu0 0.0
    %1137 = vmatpush1.xpose.msra.mxu0 0.0
    %1138 = vmatprep.subr.mxu0 0.0
    %1139 = vmatpush1.xpose.msra.mxu0 0.0
    %1140 = vmatprep.subr.mxu0 0.0
    %1141 = vmatpush1.xpose.msra.mxu0 0.0
    %1142 = vmatprep.subr.mxu0 0.0
    %1143 = vmatpush1.xpose.msra.mxu0 0.0
    %1144 = vmatprep.subr.mxu0 0.0
    %1145 = vmatpush1.xpose.msra.mxu0 0.0
    %1146 = vmatprep.subr.mxu0 0.0
    %1147 = vmatpush1.xpose.msra.mxu0 0.0
    %1148 = vmatprep.subr.mxu0 0.0
    %1149 = vmatpush1.xpose.msra.mxu0 0.0
    %1150 = vmatprep.subr.mxu0 0.0
    %1151 = vmatpush1.xpose.msra.mxu0 0.0
    %1152 = vmatprep.subr.mxu0 0.0
    %1153 = vmatpush1.xpose.msra.mxu0 0.0
    %1154 = vmatprep.subr.mxu0 0.0
    %1155 = vmatpush1.xpose.msra.mxu0 0.0
    %1156 = vmatprep.subr.mxu0 0.0
    %1157 = vmatpush1.xpose.msra.mxu0 0.0
    %1158 = vmatprep.subr.mxu0 0.0
    %1159 = vmatpush1.xpose.msra.mxu0 0.0
    %1160 = vmatprep.subr.mxu0 0.0
    %1161 = vmatpush1.xpose.msra.mxu0 0.0
    %1162 = vmatprep.mubr.f32.mxu0 0.0
    %1163 = vmatmul.mubr.f32.gmra.mrb[0].mxu0 %v1093
    %v1164 = vpop.f32.mrb[0].mxu0
    %v1165 = vadd.f32 %v1090, %v1164
    %v1166 = vpop.f32.mrb[0].mxu0
    %1167 = vdwg.mxu0
    %1168 = vset.pattern.permute.xlu0 32
    %1169 = vperm.xlu0 %1168, %v1070
    %v1170 = vpop.permute.xlu0 %1169
    %v1172 = vadd.f32 %v1165, %v1170
    %v1173 = vmul.f32 %v1078, %v1172
    %vm1174 = vcmp.ge.f32.partialorder %v1173, 0.0
    %v1175 = vmul.f32 %v1173, 0.01
    %v1176 = vsel %vm1174, %v1173, %v1175
    %v1177 = vsel %vm134, %v1176, -inf
    %v1178 = vrot.slane %v1177, 4
    %v1179 = vmax.f32 %v1177, %v1178
    %v1180 = vrot.slane %v1179, 2
    %v1181 = vmax.f32 %v1179, %v1180
    %v1182 = vrot.slane %v1181, 1
    %v1183 = vmax.f32 %v1181, %v1182
    %v1184 = vsub.f32 %v1176, %v1183
    %v1185 = vmul.f32 %v1184, 1.442695
    %v1186 = vpow.pop %v1185
    %v1187 = vsel %vm134, %v1186, 0.0
    %v1188 = vrot.slane %v1187, 4
    %v1189 = vadd.f32 %v1187, %v1188
    %v1190 = vrot.slane %v1189, 2
    %v1191 = vadd.f32 %v1189, %v1190
    %v1192 = vrot.slane %v1191, 1
    %v1193 = vadd.f32 %v1191, %v1192
    %v1194 = vrcp.pop %v1193
    %v1195 = vmul.f32 %v1186, %v1194
    %v1197 = vsel %vm134, %v1195, 0
    %1199 = vmatprep.subr.mxu0 0.0
    %1200 = vmatpush1.msra.mxu0 %v1070
    %1201 = vmatprep.subr.mxu0 0.0
    %1202 = vmatpush1.msra.mxu0 0.0
    %1203 = vmatprep.subr.mxu0 0.0
    %1204 = vmatpush1.msra.mxu0 0.0
    %1205 = vmatprep.subr.mxu0 0.0
    %1206 = vmatpush1.msra.mxu0 0.0
    %1207 = vmatprep.subr.mxu0 0.0
    %1208 = vmatpush1.msra.mxu0 0.0
    %1209 = vmatprep.subr.mxu0 0.0
    %1210 = vmatpush1.msra.mxu0 0.0
    %1211 = vmatprep.subr.mxu0 0.0
    %1212 = vmatpush1.msra.mxu0 0.0
    %1213 = vmatprep.subr.mxu0 0.0
    %1214 = vmatpush1.msra.mxu0 0.0
    %1215 = vmatprep.subr.mxu0 0.0
    %1216 = vmatpush1.msra.mxu0 0.0
    %1217 = vmatprep.subr.mxu0 0.0
    %1218 = vmatpush1.msra.mxu0 0.0
    %1219 = vmatprep.subr.mxu0 0.0
    %1220 = vmatpush1.msra.mxu0 0.0
    %1221 = vmatprep.subr.mxu0 0.0
    %1222 = vmatpush1.msra.mxu0 0.0
    %1223 = vmatprep.subr.mxu0 0.0
    %1224 = vmatpush1.msra.mxu0 0.0
    %1225 = vmatprep.subr.mxu0 0.0
    %1226 = vmatpush1.msra.mxu0 0.0
    %1227 = vmatprep.subr.mxu0 0.0
    %1228 = vmatpush1.msra.mxu0 0.0
    %1229 = vmatprep.subr.mxu0 0.0
    %1230 = vmatpush1.msra.mxu0 0.0
    %1231 = vmatprep.subr.mxu0 0.0
    %1232 = vmatpush1.msra.mxu0 0.0
    %1233 = vmatprep.subr.mxu0 0.0
    %1234 = vmatpush1.msra.mxu0 0.0
    %1235 = vmatprep.subr.mxu0 0.0
    %1236 = vmatpush1.msra.mxu0 0.0
    %1237 = vmatprep.subr.mxu0 0.0
    %1238 = vmatpush1.msra.mxu0 0.0
    %1239 = vmatprep.subr.mxu0 0.0
    %1240 = vmatpush1.msra.mxu0 0.0
    %1241 = vmatprep.subr.mxu0 0.0
    %1242 = vmatpush1.msra.mxu0 0.0
    %1243 = vmatprep.subr.mxu0 0.0
    %1244 = vmatpush1.msra.mxu0 0.0
    %1245 = vmatprep.subr.mxu0 0.0
    %1246 = vmatpush1.msra.mxu0 0.0
    %1247 = vmatprep.subr.mxu0 0.0
    %1248 = vmatpush1.msra.mxu0 0.0
    %1249 = vmatprep.subr.mxu0 0.0
    %1250 = vmatpush1.msra.mxu0 0.0
    %1251 = vmatprep.subr.mxu0 0.0
    %1252 = vmatpush1.msra.mxu0 0.0
    %1253 = vmatprep.subr.mxu0 0.0
    %1254 = vmatpush1.msra.mxu0 0.0
    %1255 = vmatprep.subr.mxu0 0.0
    %1256 = vmatpush1.msra.mxu0 0.0
    %1257 = vmatprep.subr.mxu0 0.0
    %1258 = vmatpush1.msra.mxu0 0.0
    %1259 = vmatprep.subr.mxu0 0.0
    %1260 = vmatpush1.msra.mxu0 0.0
    %1261 = vmatprep.subr.mxu0 0.0
    %1262 = vmatpush1.msra.mxu0 0.0
    %1263 = vmatprep.mubr.f32.mxu0 0.0
    %1264 = vmatmul.mubr.f32.gmra.mrb[0].mxu0 %v1197
    %v1265 = vpop.f32.mrb[0].mxu0
    %v1266 = vadd.f32 0.0, %v1265
    %v1267 = vpop.f32.mrb[0].mxu0
    %1268 = vdwg.mxu0
    %v1269 = vlaneseq
    %v1270 = vshrl.u32 %v1269, 7
    %v1271 = vsub.s32 0, %v1270
    %v1272 = vrot.slane %v1085, %v1271
    %v1274 = vsel %vm384, %v1266, 0
    %v1277 = vsel %vm384, %v1084, 0
    %1279 = vmatprep.subr.mxu0 0.0
    %1280 = vmatpush1.xpose.msra.mxu0 %v1274
    %1281 = vmatprep.subr.mxu0 0.0
    %1282 = vmatpush1.xpose.msra.mxu0 %v1277
    %1283 = vmatprep.subr.mxu0 0.0
    %1284 = vmatpush1.xpose.msra.mxu0 0.0
    %1285 = vmatprep.subr.mxu0 0.0
    %1286 = vmatpush1.xpose.msra.mxu0 0.0
    %1287 = vmatprep.subr.mxu0 0.0
    %1288 = vmatpush1.xpose.msra.mxu0 0.0
    %1289 = vmatprep.subr.mxu0 0.0
    %1290 = vmatpush1.xpose.msra.mxu0 0.0
    %1291 = vmatprep.subr.mxu0 0.0
    %1292 = vmatpush1.xpose.msra.mxu0 0.0
    %1293 = vmatprep.subr.mxu0 0.0
    %1294 = vmatpush1.xpose.msra.mxu0 0.0
    %1295 = vmatprep.subr.mxu0 0.0
    %1296 = vmatpush1.xpose.msra.mxu0 0.0
    %1297 = vmatprep.subr.mxu0 0.0
    %1298 = vmatpush1.xpose.msra.mxu0 0.0
    %1299 = vmatprep.subr.mxu0 0.0
    %1300 = vmatpush1.xpose.msra.mxu0 0.0
    %1301 = vmatprep.subr.mxu0 0.0
    %1302 = vmatpush1.xpose.msra.mxu0 0.0
    %1303 = vmatprep.subr.mxu0 0.0
    %1304 = vmatpush1.xpose.msra.mxu0 0.0
    %1305 = vmatprep.subr.mxu0 0.0
    %1306 = vmatpush1.xpose.msra.mxu0 0.0
    %1307 = vmatprep.subr.mxu0 0.0
    %1308 = vmatpush1.xpose.msra.mxu0 0.0
    %1309 = vmatprep.subr.mxu0 0.0
    %1310 = vmatpush1.xpose.msra.mxu0 0.0
    %1311 = vmatprep.subr.mxu0 0.0
    %1312 = vmatpush1.xpose.msra.mxu0 0.0
    %1313 = vmatprep.subr.mxu0 0.0
    %1314 = vmatpush1.xpose.msra.mxu0 0.0
    %1315 = vmatprep.subr.mxu0 0.0
    %1316 = vmatpush1.xpose.msra.mxu0 0.0
    %1317 = vmatprep.subr.mxu0 0.0
    %1318 = vmatpush1.xpose.msra.mxu0 0.0
    %1319 = vmatprep.subr.mxu0 0.0
    %1320 = vmatpush1.xpose.msra.mxu0 0.0
    %1321 = vmatprep.subr.mxu0 0.0
    %1322 = vmatpush1.xpose.msra.mxu0 0.0
    %1323 = vmatprep.subr.mxu0 0.0
    %1324 = vmatpush1.xpose.msra.mxu0 0.0
    %1325 = vmatprep.subr.mxu0 0.0
    %1326 = vmatpush1.xpose.msra.mxu0 0.0
    %1327 = vmatprep.subr.mxu0 0.0
    %1328 = vmatpush1.xpose.msra.mxu0 0.0
    %1329 = vmatprep.subr.mxu0 0.0
    %1330 = vmatpush1.xpose.msra.mxu0 0.0
    %1331 = vmatprep.subr.mxu0 0.0
    %1332 = vmatpush1.xpose.msra.mxu0 0.0
    %1333 = vmatprep.subr.mxu0 0.0
    %1334 = vmatpush1.xpose.msra.mxu0 0.0
    %1335 = vmatprep.subr.mxu0 0.0
    %1336 = vmatpush1.xpose.msra.mxu0 0.0
    %1337 = vmatprep.subr.mxu0 0.0
    %1338 = vmatpush1.xpose.msra.mxu0 0.0
    %1339 = vmatprep.subr.mxu0 0.0
    %1340 = vmatpush1.xpose.msra.mxu0 0.0
    %1341 = vmatprep.subr.mxu0 0.0
    %1342 = vmatpush1.xpose.msra.mxu0 0.0
    %1343 = vmatprep.mubr.f32.mxu0 0.0
    %1344 = vmatmul.mubr.f32.gmra.mrb[0].mxu0 %v1274
    %v1345 = vpop.f32.mrb[0].mxu0
    %v1346 = vadd.f32 %v1272, %v1345
    %v1347 = vpop.f32.mrb[0].mxu0
    %1348 = vdwg.mxu0
    %vm1349 = vcmask 130048
    %1350 = vst.msk [vmem:[#allocation5] sm:$0xff] %vm1349, %v1346
    %v1352 = vsel %vm384, %v1075, 0
    %1354 = vmatprep.subr.mxu0 0.0
    %1355 = vmatpush1.xpose.msra.mxu0 %v1352
    %1356 = vmatprep.subr.mxu0 0.0
    %1357 = vmatpush1.xpose.msra.mxu0 0.0
    %1358 = vmatprep.subr.mxu0 0.0
    %1359 = vmatpush1.xpose.msra.mxu0 0.0
    %1360 = vmatprep.subr.mxu0 0.0
    %1361 = vmatpush1.xpose.msra.mxu0 0.0
    %1362 = vmatprep.subr.mxu0 0.0
    %1363 = vmatpush1.xpose.msra.mxu0 0.0
    %1364 = vmatprep.subr.mxu0 0.0
    %1365 = vmatpush1.xpose.msra.mxu0 0.0
    %1366 = vmatprep.subr.mxu0 0.0
    %1367 = vmatpush1.xpose.msra.mxu0 0.0
    %1368 = vmatprep.subr.mxu0 0.0
    %1369 = vmatpush1.xpose.msra.mxu0 0.0
    %1370 = vmatprep.subr.mxu0 0.0
    %1371 = vmatpush1.xpose.msra.mxu0 0.0
    %1372 = vmatprep.subr.mxu0 0.0
    %1373 = vmatpush1.xpose.msra.mxu0 0.0
    %1374 = vmatprep.subr.mxu0 0.0
    %1375 = vmatpush1.xpose.msra.mxu0 0.0
    %1376 = vmatprep.subr.mxu0 0.0
    %1377 = vmatpush1.xpose.msra.mxu0 0.0
    %1378 = vmatprep.subr.mxu0 0.0
    %1379 = vmatpush1.xpose.msra.mxu0 0.0
    %1380 = vmatprep.subr.mxu0 0.0
    %1381 = vmatpush1.xpose.msra.mxu0 0.0
    %1382 = vmatprep.subr.mxu0 0.0
    %1383 = vmatpush1.xpose.msra.mxu0 0.0
    %1384 = vmatprep.subr.mxu0 0.0
    %1385 = vmatpush1.xpose.msra.mxu0 0.0
    %1386 = vmatprep.subr.mxu0 0.0
    %1387 = vmatpush1.xpose.msra.mxu0 0.0
    %1388 = vmatprep.subr.mxu0 0.0
    %1389 = vmatpush1.xpose.msra.mxu0 0.0
    %1390 = vmatprep.subr.mxu0 0.0
    %1391 = vmatpush1.xpose.msra.mxu0 0.0
    %1392 = vmatprep.subr.mxu0 0.0
    %1393 = vmatpush1.xpose.msra.mxu0 0.0
    %1394 = vmatprep.subr.mxu0 0.0
    %1395 = vmatpush1.xpose.msra.mxu0 0.0
    %1396 = vmatprep.subr.mxu0 0.0
    %1397 = vmatpush1.xpose.msra.mxu0 0.0
    %1398 = vmatprep.subr.mxu0 0.0
    %1399 = vmatpush1.xpose.msra.mxu0 0.0
    %1400 = vmatprep.subr.mxu0 0.0
    %1401 = vmatpush1.xpose.msra.mxu0 0.0
    %1402 = vmatprep.subr.mxu0 0.0
    %1403 = vmatpush1.xpose.msra.mxu0 0.0
    %1404 = vmatprep.subr.mxu0 0.0
    %1405 = vmatpush1.xpose.msra.mxu0 0.0
    %1406 = vmatprep.subr.mxu0 0.0
    %1407 = vmatpush1.xpose.msra.mxu0 0.0
    %1408 = vmatprep.subr.mxu0 0.0
    %1409 = vmatpush1.xpose.msra.mxu0 0.0
    %1410 = vmatprep.subr.mxu0 0.0
    %1411 = vmatpush1.xpose.msra.mxu0 0.0
    %1412 = vmatprep.subr.mxu0 0.0
    %1413 = vmatpush1.xpose.msra.mxu0 0.0
    %1414 = vmatprep.subr.mxu0 0.0
    %1415 = vmatpush1.xpose.msra.mxu0 0.0
    %1416 = vmatprep.subr.mxu0 0.0
    %1417 = vmatpush1.xpose.msra.mxu0 0.0
    %1418 = vmatprep.mubr.f32.mxu0 0.0
    %1419 = vmatmul.mubr.f32.gmra.mrb[0].mxu0 %v1093
    %v1420 = vpop.f32.mrb[0].mxu0
    %v1421 = vadd.f32 %v1090, %v1420
    %v1422 = vpop.f32.mrb[0].mxu0
    %1423 = vdwg.mxu0
    %1424 = vset.pattern.permute.xlu0 32
    %1425 = vperm.xlu0 %1424, %v1075
    %v1426 = vpop.permute.xlu0 %1425
    %v1428 = vadd.f32 %v1421, %v1426
    %v1429 = vmul.f32 %v1078, %v1428
    %vm1430 = vcmp.ge.f32.partialorder %v1429, 0.0
    %v1431 = vmul.f32 %v1429, 0.01
    %v1432 = vsel %vm1430, %v1429, %v1431
    %v1433 = vsel %vm134, %v1432, -inf
    %v1434 = vrot.slane %v1433, 4
    %v1435 = vmax.f32 %v1433, %v1434
    %v1436 = vrot.slane %v1435, 2
    %v1437 = vmax.f32 %v1435, %v1436
    %v1438 = vrot.slane %v1437, 1
    %v1439 = vmax.f32 %v1437, %v1438
    %v1440 = vsub.f32 %v1432, %v1439
    %v1441 = vmul.f32 %v1440, 1.442695
    %v1442 = vpow.pop %v1441
    %v1443 = vsel %vm134, %v1442, 0.0
    %v1444 = vrot.slane %v1443, 4
    %v1445 = vadd.f32 %v1443, %v1444
    %v1446 = vrot.slane %v1445, 2
    %v1447 = vadd.f32 %v1445, %v1446
    %v1448 = vrot.slane %v1447, 1
    %v1449 = vadd.f32 %v1447, %v1448
    %v1450 = vrcp.pop %v1449
    %v1451 = vmul.f32 %v1442, %v1450
    %v1453 = vsel %vm134, %v1451, 0
    %1455 = vmatprep.subr.mxu0 0.0
    %1456 = vmatpush1.msra.mxu0 %v1075
    %1457 = vmatprep.subr.mxu0 0.0
    %1458 = vmatpush1.msra.mxu0 0.0
    %1459 = vmatprep.subr.mxu0 0.0
    %1460 = vmatpush1.msra.mxu0 0.0
    %1461 = vmatprep.subr.mxu0 0.0
    %1462 = vmatpush1.msra.mxu0 0.0
    %1463 = vmatprep.subr.mxu0 0.0
    %1464 = vmatpush1.msra.mxu0 0.0
    %1465 = vmatprep.subr.mxu0 0.0
    %1466 = vmatpush1.msra.mxu0 0.0
    %1467 = vmatprep.subr.mxu0 0.0
    %1468 = vmatpush1.msra.mxu0 0.0
    %1469 = vmatprep.subr.mxu0 0.0
    %1470 = vmatpush1.msra.mxu0 0.0
    %1471 = vmatprep.subr.mxu0 0.0
    %1472 = vmatpush1.msra.mxu0 0.0
    %1473 = vmatprep.subr.mxu0 0.0
    %1474 = vmatpush1.msra.mxu0 0.0
    %1475 = vmatprep.subr.mxu0 0.0
    %1476 = vmatpush1.msra.mxu0 0.0
    %1477 = vmatprep.subr.mxu0 0.0
    %1478 = vmatpush1.msra.mxu0 0.0
    %1479 = vmatprep.subr.mxu0 0.0
    %1480 = vmatpush1.msra.mxu0 0.0
    %1481 = vmatprep.subr.mxu0 0.0
    %1482 = vmatpush1.msra.mxu0 0.0
    %1483 = vmatprep.subr.mxu0 0.0
    %1484 = vmatpush1.msra.mxu0 0.0
    %1485 = vmatprep.subr.mxu0 0.0
    %1486 = vmatpush1.msra.mxu0 0.0
    %1487 = vmatprep.subr.mxu0 0.0
    %1488 = vmatpush1.msra.mxu0 0.0
    %1489 = vmatprep.subr.mxu0 0.0
    %1490 = vmatpush1.msra.mxu0 0.0
    %1491 = vmatprep.subr.mxu0 0.0
    %1492 = vmatpush1.msra.mxu0 0.0
    %1493 = vmatprep.subr.mxu0 0.0
    %1494 = vmatpush1.msra.mxu0 0.0
    %1495 = vmatprep.subr.mxu0 0.0
    %1496 = vmatpush1.msra.mxu0 0.0
    %1497 = vmatprep.subr.mxu0 0.0
    %1498 = vmatpush1.msra.mxu0 0.0
    %1499 = vmatprep.subr.mxu0 0.0
    %1500 = vmatpush1.msra.mxu0 0.0
    %1501 = vmatprep.subr.mxu0 0.0
    %1502 = vmatpush1.msra.mxu0 0.0
    %1503 = vmatprep.subr.mxu0 0.0
    %1504 = vmatpush1.msra.mxu0 0.0
    %1505 = vmatprep.subr.mxu0 0.0
    %1506 = vmatpush1.msra.mxu0 0.0
    %1507 = vmatprep.subr.mxu0 0.0
    %1508 = vmatpush1.msra.mxu0 0.0
    %1509 = vmatprep.subr.mxu0 0.0
    %1510 = vmatpush1.msra.mxu0 0.0
    %1511 = vmatprep.subr.mxu0 0.0
    %1512 = vmatpush1.msra.mxu0 0.0
    %1513 = vmatprep.subr.mxu0 0.0
    %1514 = vmatpush1.msra.mxu0 0.0
    %1515 = vmatprep.subr.mxu0 0.0
    %1516 = vmatpush1.msra.mxu0 0.0
    %1517 = vmatprep.subr.mxu0 0.0
    %1518 = vmatpush1.msra.mxu0 0.0
    %1519 = vmatprep.mubr.f32.mxu0 0.0
    %1520 = vmatmul.mubr.f32.gmra.mrb[0].mxu0 %v1453
    %v1521 = vpop.f32.mrb[0].mxu0
    %v1522 = vadd.f32 0.0, %v1521
    %v1523 = vpop.f32.mrb[0].mxu0
    %1524 = vdwg.mxu0
    %v1526 = vsel %vm384, %v1522, 0
    %1528 = vmatprep.subr.mxu0 0.0
    %1529 = vmatpush1.xpose.msra.mxu0 %v1526
    %1530 = vmatprep.subr.mxu0 0.0
    %1531 = vmatpush1.xpose.msra.mxu0 %v1277
    %1532 = vmatprep.subr.mxu0 0.0
    %1533 = vmatpush1.xpose.msra.mxu0 0.0
    %1534 = vmatprep.subr.mxu0 0.0
    %1535 = vmatpush1.xpose.msra.mxu0 0.0
    %1536 = vmatprep.subr.mxu0 0.0
    %1537 = vmatpush1.xpose.msra.mxu0 0.0
    %1538 = vmatprep.subr.mxu0 0.0
    %1539 = vmatpush1.xpose.msra.mxu0 0.0
    %1540 = vmatprep.subr.mxu0 0.0
    %1541 = vmatpush1.xpose.msra.mxu0 0.0
    %1542 = vmatprep.subr.mxu0 0.0
    %1543 = vmatpush1.xpose.msra.mxu0 0.0
    %1544 = vmatprep.subr.mxu0 0.0
    %1545 = vmatpush1.xpose.msra.mxu0 0.0
    %1546 = vmatprep.subr.mxu0 0.0
    %1547 = vmatpush1.xpose.msra.mxu0 0.0
    %1548 = vmatprep.subr.mxu0 0.0
    %1549 = vmatpush1.xpose.msra.mxu0 0.0
    %1550 = vmatprep.subr.mxu0 0.0
    %1551 = vmatpush1.xpose.msra.mxu0 0.0
    %1552 = vmatprep.subr.mxu0 0.0
    %1553 = vmatpush1.xpose.msra.mxu0 0.0
    %1554 = vmatprep.subr.mxu0 0.0
    %1555 = vmatpush1.xpose.msra.mxu0 0.0
    %1556 = vmatprep.subr.mxu0 0.0
    %1557 = vmatpush1.xpose.msra.mxu0 0.0
    %1558 = vmatprep.subr.mxu0 0.0
    %1559 = vmatpush1.xpose.msra.mxu0 0.0
    %1560 = vmatprep.subr.mxu0 0.0
    %1561 = vmatpush1.xpose.msra.mxu0 0.0
    %1562 = vmatprep.subr.mxu0 0.0
    %1563 = vmatpush1.xpose.msra.mxu0 0.0
    %1564 = vmatprep.subr.mxu0 0.0
    %1565 = vmatpush1.xpose.msra.mxu0 0.0
    %1566 = vmatprep.subr.mxu0 0.0
    %1567 = vmatpush1.xpose.msra.mxu0 0.0
    %1568 = vmatprep.subr.mxu0 0.0
    %1569 = vmatpush1.xpose.msra.mxu0 0.0
    %1570 = vmatprep.subr.mxu0 0.0
    %1571 = vmatpush1.xpose.msra.mxu0 0.0
    %1572 = vmatprep.subr.mxu0 0.0
    %1573 = vmatpush1.xpose.msra.mxu0 0.0
    %1574 = vmatprep.subr.mxu0 0.0
    %1575 = vmatpush1.xpose.msra.mxu0 0.0
    %1576 = vmatprep.subr.mxu0 0.0
    %1577 = vmatpush1.xpose.msra.mxu0 0.0
    %1578 = vmatprep.subr.mxu0 0.0
    %1579 = vmatpush1.xpose.msra.mxu0 0.0
    %1580 = vmatprep.subr.mxu0 0.0
    %1581 = vmatpush1.xpose.msra.mxu0 0.0
    %1582 = vmatprep.subr.mxu0 0.0
    %1583 = vmatpush1.xpose.msra.mxu0 0.0
    %1584 = vmatprep.subr.mxu0 0.0
    %1585 = vmatpush1.xpose.msra.mxu0 0.0
    %1586 = vmatprep.subr.mxu0 0.0
    %1587 = vmatpush1.xpose.msra.mxu0 0.0
    %1588 = vmatprep.subr.mxu0 0.0
    %1589 = vmatpush1.xpose.msra.mxu0 0.0
    %1590 = vmatprep.subr.mxu0 0.0
    %1591 = vmatpush1.xpose.msra.mxu0 0.0
    %1592 = vmatprep.mubr.f32.mxu0 0.0
    %1593 = vmatmul.mubr.f32.gmra.mrb[0].mxu0 %v1526
    %v1594 = vpop.f32.mrb[0].mxu0
    %v1595 = vadd.f32 %v1272, %v1594
    %v1596 = vpop.f32.mrb[0].mxu0
    %1597 = vdwg.mxu0
    %s1598 = scalar_lea.vmem [#allocation5], 8
    %1599 = vst.msk [vmem:[%s1598] sm:$0xff] %vm1349, %v1595
    // Predicated region
    $region18: #{tpu_custom_call.1} parent=1 // pred_check
      _
    $region19: #{tpu_custom_call.1} parent=1 // pred_check_branch
      %1601 = sbr.rel (0) target = $region21
    $region20: #{tpu_custom_call.1} parent=1 // pred_region
      %s1603 = ssub.s32 256, 256
      %1604 = vsyncadd [#allocation4], %s1603
      %s1605 = sshll.u32 [#allocation5], 4
      %s1606 = int_to_ptr.vmem [resolvable:$true] %s1605
      %1611 = dma.vmem_to_hbm [thread:$0]  %s1606, 256, %s3, [#allocation4], 128, 128, 8
    $region21: #{tpu_custom_call.1} parent=1 // pred_fallthru
      _
    // Predicated region
    $region22: #{tpu_custom_call.1} parent=1 // pred_check
      _
    $region23: #{tpu_custom_call.1} parent=1 // pred_check_branch
      %1613 = sbr.rel (0) target = $region25
    $region24: #{tpu_custom_call.1} parent=1 // pred_region
      %1614 = dma.done [#allocation4], 256
    $region25: #{tpu_custom_call.1} parent=1 // pred_fallthru
      _
    %1615 = vsyncpa [#allocation3], 1
    %1616 = vsyncpa [#allocation4], 1

</llo_original>
